<compile_context>
chip_gen: v7x
topology: tpu7x:2x2x1
jax: 0.10.0
libtpu: 0.0.40
codegen_flags: <defaults>
</compile_context>

<pallas_src>
import functools

import jax
import jax.numpy as jnp
from jax import lax
from jax.experimental import pallas as pl
from jax.experimental.pallas import tpu as pltpu

block_size = 64   # causal mask buffer size in the reference (tril)
d_model = 32


def _head_kernel(x_ref, wqkv_ref, o_ref, *, h_size):
    # x_ref: (Bb, T, D) block; wqkv_ref: (D, 3H) fused [Wq*scale | Wk | Wv]
    Bb, T, D = x_ref.shape

    x = x_ref[...]                       # (Bb, T, D) f32
    w_qkv = wqkv_ref[...]                # (D, 3H)    f32

    # Single fused projection on the MXU. Flatten (Bb, T) -> rows so the MXU
    # gets one (Bb*T, D) x (D, 3H) push instead of Bb batched tiny matmuls.
    qkv = jnp.dot(x.reshape(Bb * T, D), w_qkv,
                  preferred_element_type=jnp.float32)      # (Bb*T, 3H)
    qkv = qkv.reshape(Bb, T, 3 * h_size)

    q = qkv[:, :, 0 * h_size:1 * h_size]   # 1/sqrt(H) already folded into Wq
    k = qkv[:, :, 1 * h_size:2 * h_size]
    v = qkv[:, :, 2 * h_size:3 * h_size]

    # Scores (Bb, T, T): contract the head dim directly — no k.T materialized.
    w = lax.dot_general(
        q, k,
        dimension_numbers=(((2,), (2,)), ((0,), (0,))),
        preferred_element_type=jnp.float32)

    # Causal mask (tril == 0 -> -inf), broadcast over the batch block.
    row = lax.broadcasted_iota(jnp.int32, (T, T), 0)
    col = lax.broadcasted_iota(jnp.int32, (T, T), 1)
    causal = (col <= row)[None, :, :]
    w = jnp.where(causal, w, -jnp.inf)

    # Numerically-stable softmax along the last axis (f32 throughout). Every
    # row has at least the diagonal unmasked, so no fully -inf rows.
    w_max = jnp.max(w, axis=-1, keepdims=True)
    w_exp = jnp.exp(w - w_max)
    denom = jnp.sum(w_exp, axis=-1, keepdims=True)
    w = w_exp * pl.reciprocal(denom, approx=False)

    # Output (Bb, T, H)
    out = lax.dot_general(
        w, v,
        dimension_numbers=(((2,), (1,)), ((0,), (0,))),
        preferred_element_type=jnp.float32)
    o_ref[...] = out.astype(o_ref.dtype)


def _pick_batch_block(B):
    """Largest divisor of B that is <= 16 and keeps >= 2 grid steps (v7x)."""
    target = min(16, B)
    if B >= 2:
        target = min(target, max(1, B // 2))
    for bb in range(target, 0, -1):
        if B % bb == 0:
            return bb
    return 1


def head_forward(x, wk_t, wq_t, wv_t):
    """x: (B, T, D) float32; w*_t: (D, H) pre-transposed linear weights."""
    B, T, D = x.shape
    H = wk_t.shape[1]
    assert D == d_model and T <= block_size

    # Fold the 1/sqrt(H) scale into the query weights; fuse QKV into (D, 3H).
    scale = jnp.asarray(H, jnp.float32) ** -0.5
    w_qkv = jnp.concatenate([wq_t * scale, wk_t, wv_t], axis=1)

    Bb = _pick_batch_block(B)
    grid = (B // Bb,)

    kernel = functools.partial(_head_kernel, h_size=H)

    return pl.pallas_call(
        kernel,
        out_shape=jax.ShapeDtypeStruct((B, T, H), x.dtype),
        grid_spec=pltpu.PrefetchScalarGridSpec(
            num_scalar_prefetch=0,
            grid=grid,
            in_specs=[
                pl.BlockSpec((Bb, T, D), lambda b: (b, 0, 0)),   # x block
                pl.BlockSpec((D, 3 * H), lambda b: (0, 0)),      # fused QKV
            ],
            out_specs=pl.BlockSpec((Bb, T, H), lambda b: (b, 0, 0)),
        ),
        compiler_params=pltpu.CompilerParams(
            dimension_semantics=("parallel",)),
    )(x, w_qkv)


def head_reference(x, wk_t, wq_t, wv_t):
    """Pure-JAX reference mirroring the PyTorch forward."""
    k = x @ wk_t
    q = x @ wq_t
    v = x @ wv_t
    scale = k.shape[-1] ** (-0.5)
    w = jnp.einsum("btd,bsd->bts", q, k) * scale
    t = x.shape[1]
    tril = jnp.tril(jnp.ones((t, t), dtype=bool))
    w = jnp.where(tril, w, -jnp.inf)
    w = jax.nn.softmax(w, axis=-1)
    return w @ v


if __name__ == "__main__":
    key = jax.random.PRNGKey(0)
    B, T, H = 16, 8, 16   # batch=16 (Bb=8 -> 2 grid steps), seq=8, head=16

    kx, kk, kq, kv = jax.random.split(key, 4)
    x = jax.random.normal(kx, (B, T, d_model), dtype=jnp.float32)
    # nn.Linear(d_model, h_size, bias=False) weight is (H, D); store transposed (D, H).
    wk_t = (jax.random.normal(kk, (d_model, H), dtype=jnp.float32)
            * (1.0 / jnp.sqrt(d_model)))
    wq_t = (jax.random.normal(kq, (d_model, H), dtype=jnp.float32)
            * (1.0 / jnp.sqrt(d_model)))
    wv_t = (jax.random.normal(kv, (d_model, H), dtype=jnp.float32)
            * (1.0 / jnp.sqrt(d_model)))

    out = head_forward(x, wk_t, wq_t, wv_t)
    jax.block_until_ready(out)

    ref = head_reference(x, wk_t, wq_t, wv_t)
    assert out.shape == (B, T, H)
    assert jnp.allclose(out, ref, atol=1e-5, rtol=1e-5), "mismatch vs reference"

    print("KERNEL_OK")
</pallas_src>

<mosaic_0001>
module attributes {stable_mosaic.version = 11 : i64} {
  func.func @_head_kernel(%arg0: i32, %arg1: memref<8x8x32xf32, #tpu.memory_space<vmem>>, %arg2: memref<32x48xf32, #tpu.memory_space<vmem>>, %arg3: memref<8x8x16xf32, #tpu.memory_space<vmem>>) attributes {dimension_semantics = [#tpu.dimension_semantics<parallel>], iteration_bounds = array<i64: 2>, scalar_prefetch = 0 : i64, scratch_operands = 0 : i64, tpu.core_type = #tpu.core_type<tc>, window_params = [{transform_indices = @transform_0, window_bounds = array<i64: 8, 8, 32>}, {pipeline_mode = #tpu.pipeline_mode<synchronous>, transform_indices = @transform_1, window_bounds = array<i64: 32, 48>}, {transform_indices = @transform_2, window_bounds = array<i64: 8, 8, 16>}]} {
    %c0 = arith.constant 0 : index
    %c0_0 = arith.constant 0 : index
    %c0_1 = arith.constant 0 : index
    %0 = vector.load %arg1[%c0, %c0_0, %c0_1] : memref<8x8x32xf32, #tpu.memory_space<vmem>>, vector<8x8x32xf32>
    %c0_2 = arith.constant 0 : index
    %c0_3 = arith.constant 0 : index
    %1 = vector.load %arg2[%c0_2, %c0_3] : memref<32x48xf32, #tpu.memory_space<vmem>>, vector<32x48xf32>
    %2 = vector.shape_cast %0 : vector<8x8x32xf32> to vector<64x32xf32>
    %cst = arith.constant dense<0.000000e+00> : vector<64x48xf32>
    %3 = tpu.matmul %2, %1, %cst {dimension_numbers = #tpu.dot_dimension_numbers<[1], [0], [0], [1], [0, 0, 1, 1], [], []>} : vector<64x32xf32>, vector<32x48xf32>, vector<64x48xf32> -> vector<64x48xf32>
    %4 = vector.shape_cast %3 : vector<64x48xf32> to vector<8x8x48xf32>
    %5 = vector.extract_strided_slice %4 {offsets = [0, 0, 0], sizes = [8, 8, 16], strides = [1, 1, 1]} : vector<8x8x48xf32> to vector<8x8x16xf32>
    %6 = vector.extract_strided_slice %4 {offsets = [0, 0, 16], sizes = [8, 8, 16], strides = [1, 1, 1]} : vector<8x8x48xf32> to vector<8x8x16xf32>
    %7 = vector.extract_strided_slice %4 {offsets = [0, 0, 32], sizes = [8, 8, 16], strides = [1, 1, 1]} : vector<8x8x48xf32> to vector<8x8x16xf32>
    %cst_4 = arith.constant dense<0.000000e+00> : vector<8x8x8xf32>
    %8 = tpu.matmul %5, %6, %cst_4 {dimension_numbers = #tpu.dot_dimension_numbers<[2], [2], [1], [1], [0, 0, 0, 1, 1, 1], [0], [0]>} : vector<8x8x16xf32>, vector<8x8x16xf32>, vector<8x8x8xf32> -> vector<8x8x8xf32>
    %9 = tpu.iota {dimensions = array<i32: 0>} : vector<8x8xi32>
    %10 = tpu.iota {dimensions = array<i32: 1>} : vector<8x8xi32>
    %11 = arith.cmpi sle, %10, %9 : vector<8x8xi32>
    %12 = vector.shape_cast %11 : vector<8x8xi1> to vector<1x8x8xi1>
    %cst_5 = arith.constant 0xFF800000 : f32
    %13 = vector.shape_cast %12 : vector<1x8x8xi1> to vector<1x8x8xi1>
    %14 = vector.broadcast %13 : vector<1x8x8xi1> to vector<8x8x8xi1>
    %15 = vector.broadcast %cst_5 : f32 to vector<8x8x8xf32>
    %16 = arith.select %14, %8, %15 : vector<8x8x8xi1>, vector<8x8x8xf32>
    %cst_6 = arith.constant dense<0xFF800000> : vector<8x8xf32>
    %17 = vector.multi_reduction <maximumf>, %16, %cst_6 [2] : vector<8x8x8xf32> to vector<8x8xf32>
    %18 = vector.shape_cast %17 : vector<8x8xf32> to vector<8x8x1xf32>
    %19 = vector.broadcast %18 : vector<8x8x1xf32> to vector<8x8x8xf32>
    %20 = arith.subf %16, %19 : vector<8x8x8xf32>
    %21 = math.exp %20 : vector<8x8x8xf32>
    %cst_7 = arith.constant dense<0.000000e+00> : vector<8x8xf32>
    %22 = vector.multi_reduction <add>, %21, %cst_7 [2] : vector<8x8x8xf32> to vector<8x8xf32>
    %23 = vector.shape_cast %22 : vector<8x8xf32> to vector<8x8x1xf32>
    %24 = tpu.reciprocal %23 : vector<8x8x1xf32> -> vector<8x8x1xf32>
    %25 = vector.broadcast %24 : vector<8x8x1xf32> to vector<8x8x8xf32>
    %26 = arith.mulf %21, %25 : vector<8x8x8xf32>
    %cst_8 = arith.constant dense<0.000000e+00> : vector<8x8x16xf32>
    %27 = tpu.matmul %26, %7, %cst_8 {dimension_numbers = #tpu.dot_dimension_numbers<[2], [1], [1], [2], [0, 0, 0, 1, 1, 2], [0], [0]>} : vector<8x8x8xf32>, vector<8x8x16xf32>, vector<8x8x16xf32> -> vector<8x8x16xf32>
    %c0_9 = arith.constant 0 : index
    %c0_10 = arith.constant 0 : index
    %c0_11 = arith.constant 0 : index
    %28 = vector.load %arg3[%c0_9, %c0_10, %c0_11] : memref<8x8x16xf32, #tpu.memory_space<vmem>>, vector<8x8x16xf32>
    tpu.vector_store %arg3[%c0_9, %c0_10, %c0_11], %27 {strides = array<i32>} : memref<8x8x16xf32, #tpu.memory_space<vmem>>, vector<8x8x16xf32>,
    return
  }
  func.func @transform_0(%arg0: i32) -> (i32, i32, i32) {
    %c0_i32 = arith.constant 0 : i32
    %c0_i32_0 = arith.constant 0 : i32
    %c0_i32_1 = arith.constant 0 : i32
    return %arg0, %c0_i32, %c0_i32_0 : i32, i32, i32
  }
  func.func @transform_1(%arg0: i32) -> (i32, i32) {
    %c0_i32 = arith.constant 0 : i32
    %c0_i32_0 = arith.constant 0 : i32
    %c0_i32_1 = arith.constant 0 : i32
    return %c0_i32, %c0_i32_0 : i32, i32
  }
  func.func @transform_2(%arg0: i32) -> (i32, i32, i32) {
    %c0_i32 = arith.constant 0 : i32
    %c0_i32_0 = arith.constant 0 : i32
    %c0_i32_1 = arith.constant 0 : i32
    return %arg0, %c0_i32, %c0_i32_0 : i32, i32, i32
  }
}

</mosaic_0001>

<llo_original>
// kernel: tpu_custom_call.1
$region0: #{tpu_custom_call.1}
  #allocation0 [shape = 'u32[]', space=smem, size = 0x4, offset = 0x4, fixed_abs, tag = 'smem constant byte address 0x4 - core index']
  #allocation1 [shape = 'u32[144,128]{1,0:T(1,128)}', space=vmem, size = 0x12000, scoped, tag = 'internal scratch']
  %s0 = inlined_call_operand.hbm [shape: f32[16,8,32], index: 0, kind: input, shape index: {}]
  %s1 = inlined_call_operand.hbm [shape: f32[32,48], index: 1, kind: input, shape index: {}]
  %s2 = inlined_call_operand.hbm [shape: f32[16,8,16], index: 2, kind: output, shape index: {}]
  %s3 = sld [smem:[#allocation0]]
  $region49: #{tpu_custom_call.1} parent=0
    _
  %s5 = ssub.s32 1, %s3
  %s6 = scalar_select 0, %s5, %s3
  $region1: #{tpu_custom_call.1} parent=0
    #allocation2 [shape = 'u8[65536]{0}', space=vmem, size = 0x10000, scoped, tag = 'input window, operand 0']
    #allocation3 [shape = 's32[2]{0}', space=sflag, size = 0x8, scoped, tag = 'scoped memory for tpu_custom_call.1']
    #allocation4 [shape = 's32[2]{0}', space=sflag, size = 0x8, scoped, tag = 'scoped memory for tpu_custom_call.1']
    #allocation5 [shape = 'u8[16384]{0}', space=vmem, size = 0x4000, scoped, tag = 'input window, operand 1, single buffered']
    #allocation6 [shape = 's32[1]{0}', space=sflag, size = 0x4, scoped, tag = 'scoped memory for tpu_custom_call.1']
    #allocation7 [shape = 'u8[65536]{0}', space=vmem, size = 0x10000, scoped, tag = 'output window, operand 0']
    %7 = vsyncpa [#allocation3], 0
    %s8 = scalar_lea.sflag [#allocation3], 1
    %9 = vsyncpa %s8, 0
    %10 = vsyncpa [#allocation6], 0
    %11 = vsyncpa [#allocation4], 0
    %s12 = scalar_lea.sflag [#allocation4], 1
    %13 = vsyncpa %s12, 0
    loop: start=0, step=1, limit=4
    $region2: #{tpu_custom_call.1} parent=1 // loop_pre_header
      _
    $region3: #{tpu_custom_call.1} parent=1 // loop_header
      %s15 = sphi 0, %s19
      %p16 = scmp.ge.s32.totalorder %s15, 4
      %s25 = sphi 0, %s27
      %s28 = sphi 0, %s25
      %s29 = sphi 0, %s28
      %s45 = sphi 0, %s29
      %s49 = sphi 0, %s49
      %s51 = sphi 0, %s49
      %s52 = sphi 0, %s51
      %s66 = sphi 0, %s52
      %s72 = sphi 0, %s74
      %s75 = sphi 0, %s72
      %s76 = sphi 0, %s75
      %s92 = sphi 0, %s76
    $region4: #{tpu_custom_call.1} parent=1 // loop_header_branch
      %18 = sbr.rel (%p16) target = $region8
    $region5: #{tpu_custom_call.1} parent=1 // loop_body
      %s20 = ssub.s32 %s15, 1
      %s21 = ssub.s32 %s15, 2
      %s22 = sadd.s32 %s15, 1
      %s23 = ssub.s32 %s15, %s22
      %p24 = scmp.eq.s32.totalorder %s23, 0
      %s26 = sadd.s32 %s25, 1
      %s27 = scalar_select %p24, %s25, %s26
      %p30 = pneg %p24
      %p31 = scmp.eq.s32.totalorder %s15, 1
      %p32 = por %p30, %p31
      %p33 = scmp.ne.s32.totalorder %s25, %s28
      %p34 = scmp.eq.s32.totalorder %s15, 0
      %p35 = por %p33, %p34
      %p36 = scmp.ne.s32.totalorder %s25, %s28
      %p37 = scmp.eq.s32.totalorder %s20, 1
      %p38 = por %p36, %p37
      %p39 = scmp.ne.s32.totalorder %s28, %s29
      %p40 = scmp.eq.s32.totalorder %s20, 0
      %p41 = por %p39, %p40
      %p42 = scmp.ne.s32.totalorder %s28, %s29
      %p43 = scmp.eq.s32.totalorder %s21, 1
      %p44 = por %p42, %p43
      %p46 = scmp.ne.s32.totalorder %s29, %s45
      %p47 = scmp.eq.s32.totalorder %s21, 0
      %p48 = por %p46, %p47
      %s50 = sadd.s32 %s49, 1
      %p53 = scmp.eq.s32.totalorder %s15, 1
      %p54 = scmp.ne.s32.totalorder %s49, %s51
      %p55 = scmp.eq.s32.totalorder %s15, 0
      %p56 = por %p54, %p55
      %p57 = scmp.ne.s32.totalorder %s49, %s51
      %p58 = scmp.eq.s32.totalorder %s20, 1
      %p59 = por %p57, %p58
      %p60 = scmp.ne.s32.totalorder %s51, %s52
      %p61 = scmp.eq.s32.totalorder %s20, 0
      %p62 = por %p60, %p61
      %p63 = scmp.ne.s32.totalorder %s51, %s52
      %p64 = scmp.eq.s32.totalorder %s21, 1
      %p65 = por %p63, %p64
      %p67 = scmp.ne.s32.totalorder %s52, %s66
      %p68 = scmp.eq.s32.totalorder %s21, 0
      %p69 = por %p67, %p68
      %s70 = ssub.s32 %s15, %s22
      %p71 = scmp.eq.s32.totalorder %s70, 0
      %s73 = sadd.s32 %s72, 1
      %s74 = scalar_select %p71, %s72, %s73
      %p77 = pneg %p71
      %p78 = scmp.eq.s32.totalorder %s15, 1
      %p79 = por %p77, %p78
      %p80 = scmp.ne.s32.totalorder %s72, %s75
      %p81 = scmp.eq.s32.totalorder %s15, 0
      %p82 = por %p80, %p81
      %p83 = scmp.ne.s32.totalorder %s72, %s75
      %p84 = scmp.eq.s32.totalorder %s20, 1
      %p85 = por %p83, %p84
      %p86 = scmp.ne.s32.totalorder %s75, %s76
      %p87 = scmp.eq.s32.totalorder %s20, 0
      %p88 = por %p86, %p87
      %p89 = scmp.ne.s32.totalorder %s75, %s76
      %p90 = scmp.eq.s32.totalorder %s21, 1
      %p91 = por %p89, %p90
      %p93 = scmp.ne.s32.totalorder %s76, %s92
      %p94 = scmp.eq.s32.totalorder %s21, 0
      %p95 = por %p93, %p94
      %p96 = scmp.le.s32.totalorder 1, %s15
      %p97 = scmp.lt.s32.totalorder %s15, 3
      %p98 = pnand %p96, %p97
      %p99 = pneg %p98
      // Predicated region
      $region9: #{tpu_custom_call.1} parent=5 // pred_check
        _
      $region10: #{tpu_custom_call.1} parent=5 // pred_check_branch
        %101 = sbr.rel (%p98) target = $region12
      $region11: #{tpu_custom_call.1} parent=5 // pred_region
        %s102 = ssub.s32 %s15, 1
        // Predicated region
        $region13: #{tpu_custom_call.1} parent=11 // pred_check
          %p103 = pneg %p62
        $region14: #{tpu_custom_call.1} parent=11 // pred_check_branch
          %105 = sbr.rel (%p103) target = $region16
        $region15: #{tpu_custom_call.1} parent=11 // pred_region
          %s107 = ssub.s32 512, 512
          %108 = vsyncadd [#allocation6], %s107
          %s109 = sshll.u32 [#allocation5], 4
          %s110 = int_to_ptr.vmem [resolvable:$true] %s109
          %115 = dma.hbm_to_vmem [thread:$0]  %s1, 512, %s110, [#allocation6], 128, 128, 8
        $region16: #{tpu_custom_call.1} parent=11 // pred_fallthru
          _
      $region12: #{tpu_custom_call.1} parent=5 // pred_fallthru
        _
      %p116 = scmp.lt.s32.totalorder %s15, 2
      // Predicated region
      $region17: #{tpu_custom_call.1} parent=5 // pred_check
        %p117 = pneg %p116
      $region18: #{tpu_custom_call.1} parent=5 // pred_check_branch
        %119 = sbr.rel (%p117) target = $region20
      $region19: #{tpu_custom_call.1} parent=5 // pred_region
        // Predicated region
        $region21: #{tpu_custom_call.1} parent=19 // pred_check
          %p120 = pneg %p35
        $region22: #{tpu_custom_call.1} parent=19 // pred_check_branch
          %122 = sbr.rel (%p120) target = $region24
        $region23: #{tpu_custom_call.1} parent=19 // pred_region
          %s123 = sand.u32 %s25, 1
          %s124 = scalar_lea.sflag [#allocation3], %s123
          %s125 = sand.u32 %s25, 1
          %s126 = smul.addr %s125, 64
          %s127 = scalar_lea.vmem [#allocation2], %s126
          %s128 = smul.u32 8, %s15
          %s130 = ssub.s32 1024, 1024
          %131 = vsyncadd %s124, %s130
          %s132 = smul.addr %s128, 128
          %s133 = scalar_lea.hbm %s0, %s132
          %s134 = sshll.u32 %s127, 4
          %s135 = int_to_ptr.vmem [resolvable:$true] %s134
          %140 = dma.hbm_to_vmem [thread:$0]  %s133, 1024, %s135, %s124, 128, 128, 8
        $region24: #{tpu_custom_call.1} parent=19 // pred_fallthru
          _
      $region20: #{tpu_custom_call.1} parent=5 // pred_fallthru
        _
      %p141 = scmp.le.s32.totalorder 1, %s15
      %p142 = scmp.lt.s32.totalorder %s15, 3
      %p143 = pnand %p141, %p142
      %p144 = pneg %p143
      // Predicated region
      $region25: #{tpu_custom_call.1} parent=5 // pred_check
        _
      $region26: #{tpu_custom_call.1} parent=5 // pred_check_branch
        %146 = sbr.rel (%p143) target = $region28
      $region27: #{tpu_custom_call.1} parent=5 // pred_region
        %s147 = ssub.s32 %s15, 1
        %s148 = sand.u32 %s28, 1
        %s149 = scalar_lea.sflag [#allocation3], %s148
        %s150 = sand.u32 %s28, 1
        %s151 = smul.addr %s150, 64
        %s152 = scalar_lea.vmem [#allocation2], %s151
        // Predicated region
        $region29: #{tpu_custom_call.1} parent=27 // pred_check
          %p153 = pneg %p41
        $region30: #{tpu_custom_call.1} parent=27 // pred_check_branch
          %155 = sbr.rel (%p153) target = $region32
        $region31: #{tpu_custom_call.1} parent=27 // pred_region
          %156 = dma.done %s149, 1024
        $region32: #{tpu_custom_call.1} parent=27 // pred_fallthru
          _
        // Predicated region
        $region33: #{tpu_custom_call.1} parent=27 // pred_check
          %p157 = pneg %p62
        $region34: #{tpu_custom_call.1} parent=27 // pred_check_branch
          %159 = sbr.rel (%p157) target = $region36
        $region35: #{tpu_custom_call.1} parent=27 // pred_region
          %160 = dma.done [#allocation6], 512
        $region36: #{tpu_custom_call.1} parent=27 // pred_fallthru
          _
        %s161 = sand.u32 %s28, 1
        %s162 = scalar_lea.sflag [#allocation3], %s161
        %s163 = sand.u32 %s28, 1
        %s164 = smul.addr %s163, 64
        %s165 = scalar_lea.vmem [#allocation2], %s164
        %p166 = pneg %p41
        %p167 = pneg %p38
        %p168 = pneg %p62
        %p169 = pneg %p59
        %p170 = pneg %p88
        %p171 = pneg %p85
        %s172 = sand.u32 %s75, 1
        %s173 = scalar_lea.sflag [#allocation4], %s172
        %s174 = sand.u32 %s75, 1
        %s175 = smul.addr %s174, 64
        %s176 = scalar_lea.vmem [#allocation7], %s175
        %s177 = smul.u32 8, %s20
        %s178 = smul.u32 8, %s20
        %v179 = vld [vmem:[%s152] sm:$0xff]
        %v180 = vld [vmem:[%s152 + $0x8] sm:$0xff]
        %v181 = vld [vmem:[%s152 + $0x10] sm:$0xff]
        %v182 = vld [vmem:[%s152 + $0x18] sm:$0xff]
        %v183 = vld [vmem:[%s152 + $0x20] sm:$0xff]
        %v184 = vld [vmem:[%s152 + $0x28] sm:$0xff]
        %v185 = vld [vmem:[%s152 + $0x30] sm:$0xff]
        %v186 = vld [vmem:[%s152 + $0x38] sm:$0xff]
        %v187 = vld [vmem:[#allocation5] sm:$0xff]
        %v188 = vld [vmem:[#allocation5 + $0x8] sm:$0xff]
        %v189 = vld [vmem:[#allocation5 + $0x10] sm:$0xff]
        %v190 = vld [vmem:[#allocation5 + $0x18] sm:$0xff]
        %vm191 = vcmask 261120
        %v193 = vsel %vm191, %v179, 0
        %v196 = vsel %vm191, %v180, 0
        %v199 = vsel %vm191, %v181, 0
        %v202 = vsel %vm191, %v182, 0
        %v205 = vsel %vm191, %v183, 0
        %v208 = vsel %vm191, %v184, 0
        %v211 = vsel %vm191, %v185, 0
        %v214 = vsel %vm191, %v186, 0
        %216 = vmatprep.subr.mxu0 0.0
        %217 = vmatpush1.msra.mxu0 %v187
        %218 = vmatprep.subr.mxu0 0.0
        %219 = vmatpush1.msra.mxu0 %v188
        %220 = vmatprep.subr.mxu0 0.0
        %221 = vmatpush1.msra.mxu0 %v189
        %222 = vmatprep.subr.mxu0 0.0
        %223 = vmatpush1.msra.mxu0 %v190
        %224 = vmatprep.subr.mxu0 0.0
        %225 = vmatpush1.msra.mxu0 0.0
        %226 = vmatprep.subr.mxu0 0.0
        %227 = vmatpush1.msra.mxu0 0.0
        %228 = vmatprep.subr.mxu0 0.0
        %229 = vmatpush1.msra.mxu0 0.0
        %230 = vmatprep.subr.mxu0 0.0
        %231 = vmatpush1.msra.mxu0 0.0
        %232 = vmatprep.subr.mxu0 0.0
        %233 = vmatpush1.msra.mxu0 0.0
        %234 = vmatprep.subr.mxu0 0.0
        %235 = vmatpush1.msra.mxu0 0.0
        %236 = vmatprep.subr.mxu0 0.0
        %237 = vmatpush1.msra.mxu0 0.0
        %238 = vmatprep.subr.mxu0 0.0
        %239 = vmatpush1.msra.mxu0 0.0
        %240 = vmatprep.subr.mxu0 0.0
        %241 = vmatpush1.msra.mxu0 0.0
        %242 = vmatprep.subr.mxu0 0.0
        %243 = vmatpush1.msra.mxu0 0.0
        %244 = vmatprep.subr.mxu0 0.0
        %245 = vmatpush1.msra.mxu0 0.0
        %246 = vmatprep.subr.mxu0 0.0
        %247 = vmatpush1.msra.mxu0 0.0
        %248 = vmatprep.subr.mxu0 0.0
        %249 = vmatpush1.msra.mxu0 0.0
        %250 = vmatprep.subr.mxu0 0.0
        %251 = vmatpush1.msra.mxu0 0.0
        %252 = vmatprep.subr.mxu0 0.0
        %253 = vmatpush1.msra.mxu0 0.0
        %254 = vmatprep.subr.mxu0 0.0
        %255 = vmatpush1.msra.mxu0 0.0
        %256 = vmatprep.subr.mxu0 0.0
        %257 = vmatpush1.msra.mxu0 0.0
        %258 = vmatprep.subr.mxu0 0.0
        %259 = vmatpush1.msra.mxu0 0.0
        %260 = vmatprep.subr.mxu0 0.0
        %261 = vmatpush1.msra.mxu0 0.0
        %262 = vmatprep.subr.mxu0 0.0
        %263 = vmatpush1.msra.mxu0 0.0
        %264 = vmatprep.subr.mxu0 0.0
        %265 = vmatpush1.msra.mxu0 0.0
        %266 = vmatprep.subr.mxu0 0.0
        %267 = vmatpush1.msra.mxu0 0.0
        %268 = vmatprep.subr.mxu0 0.0
        %269 = vmatpush1.msra.mxu0 0.0
        %270 = vmatprep.subr.mxu0 0.0
        %271 = vmatpush1.msra.mxu0 0.0
        %272 = vmatprep.subr.mxu0 0.0
        %273 = vmatpush1.msra.mxu0 0.0
        %274 = vmatprep.subr.mxu0 0.0
        %275 = vmatpush1.msra.mxu0 0.0
        %276 = vmatprep.subr.mxu0 0.0
        %277 = vmatpush1.msra.mxu0 0.0
        %278 = vmatprep.subr.mxu0 0.0
        %279 = vmatpush1.msra.mxu0 0.0
        %280 = vmatprep.mubr.f32.mxu0 0.0
        %281 = vmatmul.mubr.f32.gmra.mrb[0].mxu0 %v193
        %v282 = vpop.f32.mrb[0].mxu0
        %v283 = vadd.f32 0.0, %v282
        %v284 = vpop.f32.mrb[0].mxu0
        %285 = vmatprep.mubr.f32.mxu0 0.0
        %286 = vmatmul.mubr.f32.gmra.mrb[0].mxu0 %v196
        %v287 = vpop.f32.mrb[0].mxu0
        %v288 = vadd.f32 0.0, %v287
        %v289 = vpop.f32.mrb[0].mxu0
        %290 = vmatprep.mubr.f32.mxu0 0.0
        %291 = vmatmul.mubr.f32.gmra.mrb[0].mxu0 %v199
        %v292 = vpop.f32.mrb[0].mxu0
        %v293 = vadd.f32 0.0, %v292
        %v294 = vpop.f32.mrb[0].mxu0
        %295 = vmatprep.mubr.f32.mxu0 0.0
        %296 = vmatmul.mubr.f32.gmra.mrb[0].mxu0 %v202
        %v297 = vpop.f32.mrb[0].mxu0
        %v298 = vadd.f32 0.0, %v297
        %v299 = vpop.f32.mrb[0].mxu0
        %300 = vmatprep.mubr.f32.mxu0 0.0
        %301 = vmatmul.mubr.f32.gmra.mrb[0].mxu0 %v205
        %v302 = vpop.f32.mrb[0].mxu0
        %v303 = vadd.f32 0.0, %v302
        %v304 = vpop.f32.mrb[0].mxu0
        %305 = vmatprep.mubr.f32.mxu0 0.0
        %306 = vmatmul.mubr.f32.gmra.mrb[0].mxu0 %v208
        %v307 = vpop.f32.mrb[0].mxu0
        %v308 = vadd.f32 0.0, %v307
        %v309 = vpop.f32.mrb[0].mxu0
        %310 = vmatprep.mubr.f32.mxu0 0.0
        %311 = vmatmul.mubr.f32.gmra.mrb[0].mxu0 %v211
        %v312 = vpop.f32.mrb[0].mxu0
        %v313 = vadd.f32 0.0, %v312
        %v314 = vpop.f32.mrb[0].mxu0
        %315 = vmatprep.mubr.f32.mxu0 0.0
        %316 = vmatmul.mubr.f32.gmra.mrb[0].mxu0 %v214
        %v317 = vpop.f32.mrb[0].mxu0
        %v318 = vadd.f32 0.0, %v317
        %v319 = vpop.f32.mrb[0].mxu0
        %320 = vdwg.mxu0
        %322 = vrot.lane.b32.xlu0 %v283, 112
        %v323 = vpop.permute.xlu0 %322
        %vm324 = vcmask 130048
        %v325 = vsel %vm324, %v283, 0
        %v327 = vsel %vm324, %v323, 0
        %329 = vmatprep.subr.mxu0 0.0
        %330 = vmatpush1.xpose.msra.mxu0 %v327
        %331 = vmatprep.subr.mxu0 0.0
        %332 = vmatpush1.xpose.msra.mxu0 0.0
        %333 = vmatprep.subr.mxu0 0.0
        %334 = vmatpush1.xpose.msra.mxu0 0.0
        %335 = vmatprep.subr.mxu0 0.0
        %336 = vmatpush1.xpose.msra.mxu0 0.0
        %337 = vmatprep.subr.mxu0 0.0
        %338 = vmatpush1.xpose.msra.mxu0 0.0
        %339 = vmatprep.subr.mxu0 0.0
        %340 = vmatpush1.xpose.msra.mxu0 0.0
        %341 = vmatprep.subr.mxu0 0.0
        %342 = vmatpush1.xpose.msra.mxu0 0.0
        %343 = vmatprep.subr.mxu0 0.0
        %344 = vmatpush1.xpose.msra.mxu0 0.0
        %345 = vmatprep.subr.mxu0 0.0
        %346 = vmatpush1.xpose.msra.mxu0 0.0
        %347 = vmatprep.subr.mxu0 0.0
        %348 = vmatpush1.xpose.msra.mxu0 0.0
        %349 = vmatprep.subr.mxu0 0.0
        %350 = vmatpush1.xpose.msra.mxu0 0.0
        %351 = vmatprep.subr.mxu0 0.0
        %352 = vmatpush1.xpose.msra.mxu0 0.0
        %353 = vmatprep.subr.mxu0 0.0
        %354 = vmatpush1.xpose.msra.mxu0 0.0
        %355 = vmatprep.subr.mxu0 0.0
        %356 = vmatpush1.xpose.msra.mxu0 0.0
        %357 = vmatprep.subr.mxu0 0.0
        %358 = vmatpush1.xpose.msra.mxu0 0.0
        %359 = vmatprep.subr.mxu0 0.0
        %360 = vmatpush1.xpose.msra.mxu0 0.0
        %361 = vmatprep.subr.mxu0 0.0
        %362 = vmatpush1.xpose.msra.mxu0 0.0
        %363 = vmatprep.subr.mxu0 0.0
        %364 = vmatpush1.xpose.msra.mxu0 0.0
        %365 = vmatprep.subr.mxu0 0.0
        %366 = vmatpush1.xpose.msra.mxu0 0.0
        %367 = vmatprep.subr.mxu0 0.0
        %368 = vmatpush1.xpose.msra.mxu0 0.0
        %369 = vmatprep.subr.mxu0 0.0
        %370 = vmatpush1.xpose.msra.mxu0 0.0
        %371 = vmatprep.subr.mxu0 0.0
        %372 = vmatpush1.xpose.msra.mxu0 0.0
        %373 = vmatprep.subr.mxu0 0.0
        %374 = vmatpush1.xpose.msra.mxu0 0.0
        %375 = vmatprep.subr.mxu0 0.0
        %376 = vmatpush1.xpose.msra.mxu0 0.0
        %377 = vmatprep.subr.mxu0 0.0
        %378 = vmatpush1.xpose.msra.mxu0 0.0
        %379 = vmatprep.subr.mxu0 0.0
        %380 = vmatpush1.xpose.msra.mxu0 0.0
        %381 = vmatprep.subr.mxu0 0.0
        %382 = vmatpush1.xpose.msra.mxu0 0.0
        %383 = vmatprep.subr.mxu0 0.0
        %384 = vmatpush1.xpose.msra.mxu0 0.0
        %385 = vmatprep.subr.mxu0 0.0
        %386 = vmatpush1.xpose.msra.mxu0 0.0
        %387 = vmatprep.subr.mxu0 0.0
        %388 = vmatpush1.xpose.msra.mxu0 0.0
        %389 = vmatprep.subr.mxu0 0.0
        %390 = vmatpush1.xpose.msra.mxu0 0.0
        %391 = vmatprep.subr.mxu0 0.0
        %392 = vmatpush1.xpose.msra.mxu0 0.0
        %393 = vmatprep.mubr.f32.mxu0 0.0
        %394 = vmatmul.mubr.f32.gmra.mrb[0].mxu0 %v325
        %v395 = vpop.f32.mrb[0].mxu0
        %v396 = vadd.f32 0.0, %v395
        %v397 = vpop.f32.mrb[0].mxu0
        %398 = vdwg.mxu0
        %400 = vrot.lane.b32.xlu0 %v288, 112
        %v401 = vpop.permute.xlu0 %400
        %v402 = vsel %vm324, %v288, 0
        %v404 = vsel %vm324, %v401, 0
        %406 = vmatprep.subr.mxu0 0.0
        %407 = vmatpush1.xpose.msra.mxu0 %v404
        %408 = vmatprep.subr.mxu0 0.0
        %409 = vmatpush1.xpose.msra.mxu0 0.0
        %410 = vmatprep.subr.mxu0 0.0
        %411 = vmatpush1.xpose.msra.mxu0 0.0
        %412 = vmatprep.subr.mxu0 0.0
        %413 = vmatpush1.xpose.msra.mxu0 0.0
        %414 = vmatprep.subr.mxu0 0.0
        %415 = vmatpush1.xpose.msra.mxu0 0.0
        %416 = vmatprep.subr.mxu0 0.0
        %417 = vmatpush1.xpose.msra.mxu0 0.0
        %418 = vmatprep.subr.mxu0 0.0
        %419 = vmatpush1.xpose.msra.mxu0 0.0
        %420 = vmatprep.subr.mxu0 0.0
        %421 = vmatpush1.xpose.msra.mxu0 0.0
        %422 = vmatprep.subr.mxu0 0.0
        %423 = vmatpush1.xpose.msra.mxu0 0.0
        %424 = vmatprep.subr.mxu0 0.0
        %425 = vmatpush1.xpose.msra.mxu0 0.0
        %426 = vmatprep.subr.mxu0 0.0
        %427 = vmatpush1.xpose.msra.mxu0 0.0
        %428 = vmatprep.subr.mxu0 0.0
        %429 = vmatpush1.xpose.msra.mxu0 0.0
        %430 = vmatprep.subr.mxu0 0.0
        %431 = vmatpush1.xpose.msra.mxu0 0.0
        %432 = vmatprep.subr.mxu0 0.0
        %433 = vmatpush1.xpose.msra.mxu0 0.0
        %434 = vmatprep.subr.mxu0 0.0
        %435 = vmatpush1.xpose.msra.mxu0 0.0
        %436 = vmatprep.subr.mxu0 0.0
        %437 = vmatpush1.xpose.msra.mxu0 0.0
        %438 = vmatprep.subr.mxu0 0.0
        %439 = vmatpush1.xpose.msra.mxu0 0.0
        %440 = vmatprep.subr.mxu0 0.0
        %441 = vmatpush1.xpose.msra.mxu0 0.0
        %442 = vmatprep.subr.mxu0 0.0
        %443 = vmatpush1.xpose.msra.mxu0 0.0
        %444 = vmatprep.subr.mxu0 0.0
        %445 = vmatpush1.xpose.msra.mxu0 0.0
        %446 = vmatprep.subr.mxu0 0.0
        %447 = vmatpush1.xpose.msra.mxu0 0.0
        %448 = vmatprep.subr.mxu0 0.0
        %449 = vmatpush1.xpose.msra.mxu0 0.0
        %450 = vmatprep.subr.mxu0 0.0
        %451 = vmatpush1.xpose.msra.mxu0 0.0
        %452 = vmatprep.subr.mxu0 0.0
        %453 = vmatpush1.xpose.msra.mxu0 0.0
        %454 = vmatprep.subr.mxu0 0.0
        %455 = vmatpush1.xpose.msra.mxu0 0.0
        %456 = vmatprep.subr.mxu0 0.0
        %457 = vmatpush1.xpose.msra.mxu0 0.0
        %458 = vmatprep.subr.mxu0 0.0
        %459 = vmatpush1.xpose.msra.mxu0 0.0
        %460 = vmatprep.subr.mxu0 0.0
        %461 = vmatpush1.xpose.msra.mxu0 0.0
        %462 = vmatprep.subr.mxu0 0.0
        %463 = vmatpush1.xpose.msra.mxu0 0.0
        %464 = vmatprep.subr.mxu0 0.0
        %465 = vmatpush1.xpose.msra.mxu0 0.0
        %466 = vmatprep.subr.mxu0 0.0
        %467 = vmatpush1.xpose.msra.mxu0 0.0
        %468 = vmatprep.subr.mxu0 0.0
        %469 = vmatpush1.xpose.msra.mxu0 0.0
        %470 = vmatprep.mubr.f32.mxu0 0.0
        %471 = vmatmul.mubr.f32.gmra.mrb[0].mxu0 %v402
        %v472 = vpop.f32.mrb[0].mxu0
        %v473 = vadd.f32 0.0, %v472
        %v474 = vpop.f32.mrb[0].mxu0
        %475 = vdwg.mxu0
        %477 = vrot.lane.b32.xlu0 %v293, 112
        %v478 = vpop.permute.xlu0 %477
        %v479 = vsel %vm324, %v293, 0
        %v481 = vsel %vm324, %v478, 0
        %483 = vmatprep.subr.mxu0 0.0
        %484 = vmatpush1.xpose.msra.mxu0 %v481
        %485 = vmatprep.subr.mxu0 0.0
        %486 = vmatpush1.xpose.msra.mxu0 0.0
        %487 = vmatprep.subr.mxu0 0.0
        %488 = vmatpush1.xpose.msra.mxu0 0.0
        %489 = vmatprep.subr.mxu0 0.0
        %490 = vmatpush1.xpose.msra.mxu0 0.0
        %491 = vmatprep.subr.mxu0 0.0
        %492 = vmatpush1.xpose.msra.mxu0 0.0
        %493 = vmatprep.subr.mxu0 0.0
        %494 = vmatpush1.xpose.msra.mxu0 0.0
        %495 = vmatprep.subr.mxu0 0.0
        %496 = vmatpush1.xpose.msra.mxu0 0.0
        %497 = vmatprep.subr.mxu0 0.0
        %498 = vmatpush1.xpose.msra.mxu0 0.0
        %499 = vmatprep.subr.mxu0 0.0
        %500 = vmatpush1.xpose.msra.mxu0 0.0
        %501 = vmatprep.subr.mxu0 0.0
        %502 = vmatpush1.xpose.msra.mxu0 0.0
        %503 = vmatprep.subr.mxu0 0.0
        %504 = vmatpush1.xpose.msra.mxu0 0.0
        %505 = vmatprep.subr.mxu0 0.0
        %506 = vmatpush1.xpose.msra.mxu0 0.0
        %507 = vmatprep.subr.mxu0 0.0
        %508 = vmatpush1.xpose.msra.mxu0 0.0
        %509 = vmatprep.subr.mxu0 0.0
        %510 = vmatpush1.xpose.msra.mxu0 0.0
        %511 = vmatprep.subr.mxu0 0.0
        %512 = vmatpush1.xpose.msra.mxu0 0.0
        %513 = vmatprep.subr.mxu0 0.0
        %514 = vmatpush1.xpose.msra.mxu0 0.0
        %515 = vmatprep.subr.mxu0 0.0
        %516 = vmatpush1.xpose.msra.mxu0 0.0
        %517 = vmatprep.subr.mxu0 0.0
        %518 = vmatpush1.xpose.msra.mxu0 0.0
        %519 = vmatprep.subr.mxu0 0.0
        %520 = vmatpush1.xpose.msra.mxu0 0.0
        %521 = vmatprep.subr.mxu0 0.0
        %522 = vmatpush1.xpose.msra.mxu0 0.0
        %523 = vmatprep.subr.mxu0 0.0
        %524 = vmatpush1.xpose.msra.mxu0 0.0
        %525 = vmatprep.subr.mxu0 0.0
        %526 = vmatpush1.xpose.msra.mxu0 0.0
        %527 = vmatprep.subr.mxu0 0.0
        %528 = vmatpush1.xpose.msra.mxu0 0.0
        %529 = vmatprep.subr.mxu0 0.0
        %530 = vmatpush1.xpose.msra.mxu0 0.0
        %531 = vmatprep.subr.mxu0 0.0
        %532 = vmatpush1.xpose.msra.mxu0 0.0
        %533 = vmatprep.subr.mxu0 0.0
        %534 = vmatpush1.xpose.msra.mxu0 0.0
        %535 = vmatprep.subr.mxu0 0.0
        %536 = vmatpush1.xpose.msra.mxu0 0.0
        %537 = vmatprep.subr.mxu0 0.0
        %538 = vmatpush1.xpose.msra.mxu0 0.0
        %539 = vmatprep.subr.mxu0 0.0
        %540 = vmatpush1.xpose.msra.mxu0 0.0
        %541 = vmatprep.subr.mxu0 0.0
        %542 = vmatpush1.xpose.msra.mxu0 0.0
        %543 = vmatprep.subr.mxu0 0.0
        %544 = vmatpush1.xpose.msra.mxu0 0.0
        %545 = vmatprep.subr.mxu0 0.0
        %546 = vmatpush1.xpose.msra.mxu0 0.0
        %547 = vmatprep.mubr.f32.mxu0 0.0
        %548 = vmatmul.mubr.f32.gmra.mrb[0].mxu0 %v479
        %v549 = vpop.f32.mrb[0].mxu0
        %v550 = vadd.f32 0.0, %v549
        %v551 = vpop.f32.mrb[0].mxu0
        %552 = vdwg.mxu0
        %554 = vrot.lane.b32.xlu0 %v298, 112
        %v555 = vpop.permute.xlu0 %554
        %v556 = vsel %vm324, %v298, 0
        %v558 = vsel %vm324, %v555, 0
        %560 = vmatprep.subr.mxu0 0.0
        %561 = vmatpush1.xpose.msra.mxu0 %v558
        %562 = vmatprep.subr.mxu0 0.0
        %563 = vmatpush1.xpose.msra.mxu0 0.0
        %564 = vmatprep.subr.mxu0 0.0
        %565 = vmatpush1.xpose.msra.mxu0 0.0
        %566 = vmatprep.subr.mxu0 0.0
        %567 = vmatpush1.xpose.msra.mxu0 0.0
        %568 = vmatprep.subr.mxu0 0.0
        %569 = vmatpush1.xpose.msra.mxu0 0.0
        %570 = vmatprep.subr.mxu0 0.0
        %571 = vmatpush1.xpose.msra.mxu0 0.0
        %572 = vmatprep.subr.mxu0 0.0
        %573 = vmatpush1.xpose.msra.mxu0 0.0
        %574 = vmatprep.subr.mxu0 0.0
        %575 = vmatpush1.xpose.msra.mxu0 0.0
        %576 = vmatprep.subr.mxu0 0.0
        %577 = vmatpush1.xpose.msra.mxu0 0.0
        %578 = vmatprep.subr.mxu0 0.0
        %579 = vmatpush1.xpose.msra.mxu0 0.0
        %580 = vmatprep.subr.mxu0 0.0
        %581 = vmatpush1.xpose.msra.mxu0 0.0
        %582 = vmatprep.subr.mxu0 0.0
        %583 = vmatpush1.xpose.msra.mxu0 0.0
        %584 = vmatprep.subr.mxu0 0.0
        %585 = vmatpush1.xpose.msra.mxu0 0.0
        %586 = vmatprep.subr.mxu0 0.0
        %587 = vmatpush1.xpose.msra.mxu0 0.0
        %588 = vmatprep.subr.mxu0 0.0
        %589 = vmatpush1.xpose.msra.mxu0 0.0
        %590 = vmatprep.subr.mxu0 0.0
        %591 = vmatpush1.xpose.msra.mxu0 0.0
        %592 = vmatprep.subr.mxu0 0.0
        %593 = vmatpush1.xpose.msra.mxu0 0.0
        %594 = vmatprep.subr.mxu0 0.0
        %595 = vmatpush1.xpose.msra.mxu0 0.0
        %596 = vmatprep.subr.mxu0 0.0
        %597 = vmatpush1.xpose.msra.mxu0 0.0
        %598 = vmatprep.subr.mxu0 0.0
        %599 = vmatpush1.xpose.msra.mxu0 0.0
        %600 = vmatprep.subr.mxu0 0.0
        %601 = vmatpush1.xpose.msra.mxu0 0.0
        %602 = vmatprep.subr.mxu0 0.0
        %603 = vmatpush1.xpose.msra.mxu0 0.0
        %604 = vmatprep.subr.mxu0 0.0
        %605 = vmatpush1.xpose.msra.mxu0 0.0
        %606 = vmatprep.subr.mxu0 0.0
        %607 = vmatpush1.xpose.msra.mxu0 0.0
        %608 = vmatprep.subr.mxu0 0.0
        %609 = vmatpush1.xpose.msra.mxu0 0.0
        %610 = vmatprep.subr.mxu0 0.0
        %611 = vmatpush1.xpose.msra.mxu0 0.0
        %612 = vmatprep.subr.mxu0 0.0
        %613 = vmatpush1.xpose.msra.mxu0 0.0
        %614 = vmatprep.subr.mxu0 0.0
        %615 = vmatpush1.xpose.msra.mxu0 0.0
        %616 = vmatprep.subr.mxu0 0.0
        %617 = vmatpush1.xpose.msra.mxu0 0.0
        %618 = vmatprep.subr.mxu0 0.0
        %619 = vmatpush1.xpose.msra.mxu0 0.0
        %620 = vmatprep.subr.mxu0 0.0
        %621 = vmatpush1.xpose.msra.mxu0 0.0
        %622 = vmatprep.subr.mxu0 0.0
        %623 = vmatpush1.xpose.msra.mxu0 0.0
        %624 = vmatprep.mubr.f32.mxu0 0.0
        %625 = vmatmul.mubr.f32.gmra.mrb[0].mxu0 %v556
        %v626 = vpop.f32.mrb[0].mxu0
        %v627 = vadd.f32 0.0, %v626
        %v628 = vpop.f32.mrb[0].mxu0
        %629 = vdwg.mxu0
        %631 = vrot.lane.b32.xlu0 %v303, 112
        %v632 = vpop.permute.xlu0 %631
        %v633 = vsel %vm324, %v303, 0
        %v635 = vsel %vm324, %v632, 0
        %637 = vmatprep.subr.mxu0 0.0
        %638 = vmatpush1.xpose.msra.mxu0 %v635
        %639 = vmatprep.subr.mxu0 0.0
        %640 = vmatpush1.xpose.msra.mxu0 0.0
        %641 = vmatprep.subr.mxu0 0.0
        %642 = vmatpush1.xpose.msra.mxu0 0.0
        %643 = vmatprep.subr.mxu0 0.0
        %644 = vmatpush1.xpose.msra.mxu0 0.0
        %645 = vmatprep.subr.mxu0 0.0
        %646 = vmatpush1.xpose.msra.mxu0 0.0
        %647 = vmatprep.subr.mxu0 0.0
        %648 = vmatpush1.xpose.msra.mxu0 0.0
        %649 = vmatprep.subr.mxu0 0.0
        %650 = vmatpush1.xpose.msra.mxu0 0.0
        %651 = vmatprep.subr.mxu0 0.0
        %652 = vmatpush1.xpose.msra.mxu0 0.0
        %653 = vmatprep.subr.mxu0 0.0
        %654 = vmatpush1.xpose.msra.mxu0 0.0
        %655 = vmatprep.subr.mxu0 0.0
        %656 = vmatpush1.xpose.msra.mxu0 0.0
        %657 = vmatprep.subr.mxu0 0.0
        %658 = vmatpush1.xpose.msra.mxu0 0.0
        %659 = vmatprep.subr.mxu0 0.0
        %660 = vmatpush1.xpose.msra.mxu0 0.0
        %661 = vmatprep.subr.mxu0 0.0
        %662 = vmatpush1.xpose.msra.mxu0 0.0
        %663 = vmatprep.subr.mxu0 0.0
        %664 = vmatpush1.xpose.msra.mxu0 0.0
        %665 = vmatprep.subr.mxu0 0.0
        %666 = vmatpush1.xpose.msra.mxu0 0.0
        %667 = vmatprep.subr.mxu0 0.0
        %668 = vmatpush1.xpose.msra.mxu0 0.0
        %669 = vmatprep.subr.mxu0 0.0
        %670 = vmatpush1.xpose.msra.mxu0 0.0
        %671 = vmatprep.subr.mxu0 0.0
        %672 = vmatpush1.xpose.msra.mxu0 0.0
        %673 = vmatprep.subr.mxu0 0.0
        %674 = vmatpush1.xpose.msra.mxu0 0.0
        %675 = vmatprep.subr.mxu0 0.0
        %676 = vmatpush1.xpose.msra.mxu0 0.0
        %677 = vmatprep.subr.mxu0 0.0
        %678 = vmatpush1.xpose.msra.mxu0 0.0
        %679 = vmatprep.subr.mxu0 0.0
        %680 = vmatpush1.xpose.msra.mxu0 0.0
        %681 = vmatprep.subr.mxu0 0.0
        %682 = vmatpush1.xpose.msra.mxu0 0.0
        %683 = vmatprep.subr.mxu0 0.0
        %684 = vmatpush1.xpose.msra.mxu0 0.0
        %685 = vmatprep.subr.mxu0 0.0
        %686 = vmatpush1.xpose.msra.mxu0 0.0
        %687 = vmatprep.subr.mxu0 0.0
        %688 = vmatpush1.xpose.msra.mxu0 0.0
        %689 = vmatprep.subr.mxu0 0.0
        %690 = vmatpush1.xpose.msra.mxu0 0.0
        %691 = vmatprep.subr.mxu0 0.0
        %692 = vmatpush1.xpose.msra.mxu0 0.0
        %693 = vmatprep.subr.mxu0 0.0
        %694 = vmatpush1.xpose.msra.mxu0 0.0
        %695 = vmatprep.subr.mxu0 0.0
        %696 = vmatpush1.xpose.msra.mxu0 0.0
        %697 = vmatprep.subr.mxu0 0.0
        %698 = vmatpush1.xpose.msra.mxu0 0.0
        %699 = vmatprep.subr.mxu0 0.0
        %700 = vmatpush1.xpose.msra.mxu0 0.0
        %701 = vmatprep.mubr.f32.mxu0 0.0
        %702 = vmatmul.mubr.f32.gmra.mrb[0].mxu0 %v633
        %v703 = vpop.f32.mrb[0].mxu0
        %v704 = vadd.f32 0.0, %v703
        %v705 = vpop.f32.mrb[0].mxu0
        %706 = vdwg.mxu0
        %708 = vrot.lane.b32.xlu0 %v308, 112
        %v709 = vpop.permute.xlu0 %708
        %v710 = vsel %vm324, %v308, 0
        %v712 = vsel %vm324, %v709, 0
        %714 = vmatprep.subr.mxu0 0.0
        %715 = vmatpush1.xpose.msra.mxu0 %v712
        %716 = vmatprep.subr.mxu0 0.0
        %717 = vmatpush1.xpose.msra.mxu0 0.0
        %718 = vmatprep.subr.mxu0 0.0
        %719 = vmatpush1.xpose.msra.mxu0 0.0
        %720 = vmatprep.subr.mxu0 0.0
        %721 = vmatpush1.xpose.msra.mxu0 0.0
        %722 = vmatprep.subr.mxu0 0.0
        %723 = vmatpush1.xpose.msra.mxu0 0.0
        %724 = vmatprep.subr.mxu0 0.0
        %725 = vmatpush1.xpose.msra.mxu0 0.0
        %726 = vmatprep.subr.mxu0 0.0
        %727 = vmatpush1.xpose.msra.mxu0 0.0
        %728 = vmatprep.subr.mxu0 0.0
        %729 = vmatpush1.xpose.msra.mxu0 0.0
        %730 = vmatprep.subr.mxu0 0.0
        %731 = vmatpush1.xpose.msra.mxu0 0.0
        %732 = vmatprep.subr.mxu0 0.0
        %733 = vmatpush1.xpose.msra.mxu0 0.0
        %734 = vmatprep.subr.mxu0 0.0
        %735 = vmatpush1.xpose.msra.mxu0 0.0
        %736 = vmatprep.subr.mxu0 0.0
        %737 = vmatpush1.xpose.msra.mxu0 0.0
        %738 = vmatprep.subr.mxu0 0.0
        %739 = vmatpush1.xpose.msra.mxu0 0.0
        %740 = vmatprep.subr.mxu0 0.0
        %741 = vmatpush1.xpose.msra.mxu0 0.0
        %742 = vmatprep.subr.mxu0 0.0
        %743 = vmatpush1.xpose.msra.mxu0 0.0
        %744 = vmatprep.subr.mxu0 0.0
        %745 = vmatpush1.xpose.msra.mxu0 0.0
        %746 = vmatprep.subr.mxu0 0.0
        %747 = vmatpush1.xpose.msra.mxu0 0.0
        %748 = vmatprep.subr.mxu0 0.0
        %749 = vmatpush1.xpose.msra.mxu0 0.0
        %750 = vmatprep.subr.mxu0 0.0
        %751 = vmatpush1.xpose.msra.mxu0 0.0
        %752 = vmatprep.subr.mxu0 0.0
        %753 = vmatpush1.xpose.msra.mxu0 0.0
        %754 = vmatprep.subr.mxu0 0.0
        %755 = vmatpush1.xpose.msra.mxu0 0.0
        %756 = vmatprep.subr.mxu0 0.0
        %757 = vmatpush1.xpose.msra.mxu0 0.0
        %758 = vmatprep.subr.mxu0 0.0
        %759 = vmatpush1.xpose.msra.mxu0 0.0
        %760 = vmatprep.subr.mxu0 0.0
        %761 = vmatpush1.xpose.msra.mxu0 0.0
        %762 = vmatprep.subr.mxu0 0.0
        %763 = vmatpush1.xpose.msra.mxu0 0.0
        %764 = vmatprep.subr.mxu0 0.0
        %765 = vmatpush1.xpose.msra.mxu0 0.0
        %766 = vmatprep.subr.mxu0 0.0
        %767 = vmatpush1.xpose.msra.mxu0 0.0
        %768 = vmatprep.subr.mxu0 0.0
        %769 = vmatpush1.xpose.msra.mxu0 0.0
        %770 = vmatprep.subr.mxu0 0.0
        %771 = vmatpush1.xpose.msra.mxu0 0.0
        %772 = vmatprep.subr.mxu0 0.0
        %773 = vmatpush1.xpose.msra.mxu0 0.0
        %774 = vmatprep.subr.mxu0 0.0
        %775 = vmatpush1.xpose.msra.mxu0 0.0
        %776 = vmatprep.subr.mxu0 0.0
        %777 = vmatpush1.xpose.msra.mxu0 0.0
        %778 = vmatprep.mubr.f32.mxu0 0.0
        %779 = vmatmul.mubr.f32.gmra.mrb[0].mxu0 %v710
        %v780 = vpop.f32.mrb[0].mxu0
        %v781 = vadd.f32 0.0, %v780
        %v782 = vpop.f32.mrb[0].mxu0
        %783 = vdwg.mxu0
        %785 = vrot.lane.b32.xlu0 %v313, 112
        %v786 = vpop.permute.xlu0 %785
        %v787 = vsel %vm324, %v313, 0
        %v789 = vsel %vm324, %v786, 0
        %791 = vmatprep.subr.mxu0 0.0
        %792 = vmatpush1.xpose.msra.mxu0 %v789
        %793 = vmatprep.subr.mxu0 0.0
        %794 = vmatpush1.xpose.msra.mxu0 0.0
        %795 = vmatprep.subr.mxu0 0.0
        %796 = vmatpush1.xpose.msra.mxu0 0.0
        %797 = vmatprep.subr.mxu0 0.0
        %798 = vmatpush1.xpose.msra.mxu0 0.0
        %799 = vmatprep.subr.mxu0 0.0
        %800 = vmatpush1.xpose.msra.mxu0 0.0
        %801 = vmatprep.subr.mxu0 0.0
        %802 = vmatpush1.xpose.msra.mxu0 0.0
        %803 = vmatprep.subr.mxu0 0.0
        %804 = vmatpush1.xpose.msra.mxu0 0.0
        %805 = vmatprep.subr.mxu0 0.0
        %806 = vmatpush1.xpose.msra.mxu0 0.0
        %807 = vmatprep.subr.mxu0 0.0
        %808 = vmatpush1.xpose.msra.mxu0 0.0
        %809 = vmatprep.subr.mxu0 0.0
        %810 = vmatpush1.xpose.msra.mxu0 0.0
        %811 = vmatprep.subr.mxu0 0.0
        %812 = vmatpush1.xpose.msra.mxu0 0.0
        %813 = vmatprep.subr.mxu0 0.0
        %814 = vmatpush1.xpose.msra.mxu0 0.0
        %815 = vmatprep.subr.mxu0 0.0
        %816 = vmatpush1.xpose.msra.mxu0 0.0
        %817 = vmatprep.subr.mxu0 0.0
        %818 = vmatpush1.xpose.msra.mxu0 0.0
        %819 = vmatprep.subr.mxu0 0.0
        %820 = vmatpush1.xpose.msra.mxu0 0.0
        %821 = vmatprep.subr.mxu0 0.0
        %822 = vmatpush1.xpose.msra.mxu0 0.0
        %823 = vmatprep.subr.mxu0 0.0
        %824 = vmatpush1.xpose.msra.mxu0 0.0
        %825 = vmatprep.subr.mxu0 0.0
        %826 = vmatpush1.xpose.msra.mxu0 0.0
        %827 = vmatprep.subr.mxu0 0.0
        %828 = vmatpush1.xpose.msra.mxu0 0.0
        %829 = vmatprep.subr.mxu0 0.0
        %830 = vmatpush1.xpose.msra.mxu0 0.0
        %831 = vmatprep.subr.mxu0 0.0
        %832 = vmatpush1.xpose.msra.mxu0 0.0
        %833 = vmatprep.subr.mxu0 0.0
        %834 = vmatpush1.xpose.msra.mxu0 0.0
        %835 = vmatprep.subr.mxu0 0.0
        %836 = vmatpush1.xpose.msra.mxu0 0.0
        %837 = vmatprep.subr.mxu0 0.0
        %838 = vmatpush1.xpose.msra.mxu0 0.0
        %839 = vmatprep.subr.mxu0 0.0
        %840 = vmatpush1.xpose.msra.mxu0 0.0
        %841 = vmatprep.subr.mxu0 0.0
        %842 = vmatpush1.xpose.msra.mxu0 0.0
        %843 = vmatprep.subr.mxu0 0.0
        %844 = vmatpush1.xpose.msra.mxu0 0.0
        %845 = vmatprep.subr.mxu0 0.0
        %846 = vmatpush1.xpose.msra.mxu0 0.0
        %847 = vmatprep.subr.mxu0 0.0
        %848 = vmatpush1.xpose.msra.mxu0 0.0
        %849 = vmatprep.subr.mxu0 0.0
        %850 = vmatpush1.xpose.msra.mxu0 0.0
        %851 = vmatprep.subr.mxu0 0.0
        %852 = vmatpush1.xpose.msra.mxu0 0.0
        %853 = vmatprep.subr.mxu0 0.0
        %854 = vmatpush1.xpose.msra.mxu0 0.0
        %855 = vmatprep.mubr.f32.mxu0 0.0
        %856 = vmatmul.mubr.f32.gmra.mrb[0].mxu0 %v787
        %v857 = vpop.f32.mrb[0].mxu0
        %v858 = vadd.f32 0.0, %v857
        %v859 = vpop.f32.mrb[0].mxu0
        %860 = vdwg.mxu0
        %862 = vrot.lane.b32.xlu0 %v318, 112
        %v863 = vpop.permute.xlu0 %862
        %v864 = vsel %vm324, %v318, 0
        %v866 = vsel %vm324, %v863, 0
        %868 = vmatprep.subr.mxu0 0.0
        %869 = vmatpush1.xpose.msra.mxu0 %v866
        %870 = vmatprep.subr.mxu0 0.0
        %871 = vmatpush1.xpose.msra.mxu0 0.0
        %872 = vmatprep.subr.mxu0 0.0
        %873 = vmatpush1.xpose.msra.mxu0 0.0
        %874 = vmatprep.subr.mxu0 0.0
        %875 = vmatpush1.xpose.msra.mxu0 0.0
        %876 = vmatprep.subr.mxu0 0.0
        %877 = vmatpush1.xpose.msra.mxu0 0.0
        %878 = vmatprep.subr.mxu0 0.0
        %879 = vmatpush1.xpose.msra.mxu0 0.0
        %880 = vmatprep.subr.mxu0 0.0
        %881 = vmatpush1.xpose.msra.mxu0 0.0
        %882 = vmatprep.subr.mxu0 0.0
        %883 = vmatpush1.xpose.msra.mxu0 0.0
        %884 = vmatprep.subr.mxu0 0.0
        %885 = vmatpush1.xpose.msra.mxu0 0.0
        %886 = vmatprep.subr.mxu0 0.0
        %887 = vmatpush1.xpose.msra.mxu0 0.0
        %888 = vmatprep.subr.mxu0 0.0
        %889 = vmatpush1.xpose.msra.mxu0 0.0
        %890 = vmatprep.subr.mxu0 0.0
        %891 = vmatpush1.xpose.msra.mxu0 0.0
        %892 = vmatprep.subr.mxu0 0.0
        %893 = vmatpush1.xpose.msra.mxu0 0.0
        %894 = vmatprep.subr.mxu0 0.0
        %895 = vmatpush1.xpose.msra.mxu0 0.0
        %896 = vmatprep.subr.mxu0 0.0
        %897 = vmatpush1.xpose.msra.mxu0 0.0
        %898 = vmatprep.subr.mxu0 0.0
        %899 = vmatpush1.xpose.msra.mxu0 0.0
        %900 = vmatprep.subr.mxu0 0.0
        %901 = vmatpush1.xpose.msra.mxu0 0.0
        %902 = vmatprep.subr.mxu0 0.0
        %903 = vmatpush1.xpose.msra.mxu0 0.0
        %904 = vmatprep.subr.mxu0 0.0
        %905 = vmatpush1.xpose.msra.mxu0 0.0
        %906 = vmatprep.subr.mxu0 0.0
        %907 = vmatpush1.xpose.msra.mxu0 0.0
        %908 = vmatprep.subr.mxu0 0.0
        %909 = vmatpush1.xpose.msra.mxu0 0.0
        %910 = vmatprep.subr.mxu0 0.0
        %911 = vmatpush1.xpose.msra.mxu0 0.0
        %912 = vmatprep.subr.mxu0 0.0
        %913 = vmatpush1.xpose.msra.mxu0 0.0
        %914 = vmatprep.subr.mxu0 0.0
        %915 = vmatpush1.xpose.msra.mxu0 0.0
        %916 = vmatprep.subr.mxu0 0.0
        %917 = vmatpush1.xpose.msra.mxu0 0.0
        %918 = vmatprep.subr.mxu0 0.0
        %919 = vmatpush1.xpose.msra.mxu0 0.0
        %920 = vmatprep.subr.mxu0 0.0
        %921 = vmatpush1.xpose.msra.mxu0 0.0
        %922 = vmatprep.subr.mxu0 0.0
        %923 = vmatpush1.xpose.msra.mxu0 0.0
        %924 = vmatprep.subr.mxu0 0.0
        %925 = vmatpush1.xpose.msra.mxu0 0.0
        %926 = vmatprep.subr.mxu0 0.0
        %927 = vmatpush1.xpose.msra.mxu0 0.0
        %928 = vmatprep.subr.mxu0 0.0
        %929 = vmatpush1.xpose.msra.mxu0 0.0
        %930 = vmatprep.subr.mxu0 0.0
        %931 = vmatpush1.xpose.msra.mxu0 0.0
        %932 = vmatprep.mubr.f32.mxu0 0.0
        %933 = vmatmul.mubr.f32.gmra.mrb[0].mxu0 %v864
        %v934 = vpop.f32.mrb[0].mxu0
        %v935 = vadd.f32 0.0, %v934
        %v936 = vpop.f32.mrb[0].mxu0
        %937 = vdwg.mxu0
        %v938 = vlaneseq
        %v939 = vshrl.u32 %v938, 7
        %v940 = vlaneseq
        %v941 = vand.u32 %v940, 127
        %vm942 = vcmp.le.s32.totalorder %v941, %v939
        %v943 = vsel %vm942, 1, 0
        %vm944 = vcmp.eq.s32.totalorder %v943, 1
        %v945 = vsel %vm944, %v396, -inf
        %v946 = vsel %vm944, %v473, -inf
        %v947 = vsel %vm944, %v550, -inf
        %v948 = vsel %vm944, %v627, -inf
        %v949 = vsel %vm944, %v704, -inf
        %v950 = vsel %vm944, %v781, -inf
        %v951 = vsel %vm944, %v858, -inf
        %v952 = vsel %vm944, %v935, -inf
        %vm953 = vcmask 64512
        %v954 = vsel %vm953, %v945, -inf
        %955 = vmax.xlane.f32.xlu0 %v954
        %v956 = vpop.xlane.xlu0 %955
        %v957 = vsel %vm953, %v946, -inf
        %958 = vmax.xlane.f32.xlu0 %v957
        %v959 = vpop.xlane.xlu0 %958
        %v960 = vsel %vm953, %v947, -inf
        %961 = vmax.xlane.f32.xlu0 %v960
        %v962 = vpop.xlane.xlu0 %961
        %v963 = vsel %vm953, %v948, -inf
        %964 = vmax.xlane.f32.xlu0 %v963
        %v965 = vpop.xlane.xlu0 %964
        %v966 = vsel %vm953, %v949, -inf
        %967 = vmax.xlane.f32.xlu0 %v966
        %v968 = vpop.xlane.xlu0 %967
        %v969 = vsel %vm953, %v950, -inf
        %970 = vmax.xlane.f32.xlu0 %v969
        %v971 = vpop.xlane.xlu0 %970
        %v972 = vsel %vm953, %v951, -inf
        %973 = vmax.xlane.f32.xlu0 %v972
        %v974 = vpop.xlane.xlu0 %973
        %v975 = vsel %vm953, %v952, -inf
        %976 = vmax.xlane.f32.xlu0 %v975
        %v977 = vpop.xlane.xlu0 %976
        %v978 = vsub.f32 %v945, %v956
        %v979 = vsub.f32 %v946, %v959
        %v980 = vsub.f32 %v947, %v962
        %v981 = vsub.f32 %v948, %v965
        %v982 = vsub.f32 %v949, %v968
        %v983 = vsub.f32 %v950, %v971
        %v984 = vsub.f32 %v951, %v974
        %v985 = vsub.f32 %v952, %v977
        %v986 = vmul.f32 %v978, 1.442695
        %v987 = vpow.pop %v986
        %v988 = vmul.f32 %v979, 1.442695
        %v989 = vpow.pop %v988
        %v990 = vmul.f32 %v980, 1.442695
        %v991 = vpow.pop %v990
        %v992 = vmul.f32 %v981, 1.442695
        %v993 = vpow.pop %v992
        %v994 = vmul.f32 %v982, 1.442695
        %v995 = vpow.pop %v994
        %v996 = vmul.f32 %v983, 1.442695
        %v997 = vpow.pop %v996
        %v998 = vmul.f32 %v984, 1.442695
        %v999 = vpow.pop %v998
        %v1000 = vmul.f32 %v985, 1.442695
        %v1001 = vpow.pop %v1000
        %v1002 = vsel %vm953, %v987, 0.0
        %1003 = vadd.xlane.f32.xlu0 %v1002
        %v1004 = vpop.xlane.xlu0 %1003
        %v1005 = vsel %vm953, %v989, 0.0
        %1006 = vadd.xlane.f32.xlu0 %v1005
        %v1007 = vpop.xlane.xlu0 %1006
        %v1008 = vsel %vm953, %v991, 0.0
        %1009 = vadd.xlane.f32.xlu0 %v1008
        %v1010 = vpop.xlane.xlu0 %1009
        %v1011 = vsel %vm953, %v993, 0.0
        %1012 = vadd.xlane.f32.xlu0 %v1011
        %v1013 = vpop.xlane.xlu0 %1012
        %v1014 = vsel %vm953, %v995, 0.0
        %1015 = vadd.xlane.f32.xlu0 %v1014
        %v1016 = vpop.xlane.xlu0 %1015
        %v1017 = vsel %vm953, %v997, 0.0
        %1018 = vadd.xlane.f32.xlu0 %v1017
        %v1019 = vpop.xlane.xlu0 %1018
        %v1020 = vsel %vm953, %v999, 0.0
        %1021 = vadd.xlane.f32.xlu0 %v1020
        %v1022 = vpop.xlane.xlu0 %1021
        %v1023 = vsel %vm953, %v1001, 0.0
        %1024 = vadd.xlane.f32.xlu0 %v1023
        %v1025 = vpop.xlane.xlu0 %1024
        %v1026 = vrcp.pop %v1004
        %v1027 = vrcp.pop %v1007
        %v1028 = vrcp.pop %v1010
        %v1029 = vrcp.pop %v1013
        %v1030 = vrcp.pop %v1016
        %v1031 = vrcp.pop %v1019
        %v1032 = vrcp.pop %v1022
        %v1033 = vrcp.pop %v1025
        %v1034 = vmul.f32 %v987, %v1026
        %v1035 = vmul.f32 %v989, %v1027
        %v1036 = vmul.f32 %v991, %v1028
        %v1037 = vmul.f32 %v993, %v1029
        %v1038 = vmul.f32 %v995, %v1030
        %v1039 = vmul.f32 %v997, %v1031
        %v1040 = vmul.f32 %v999, %v1032
        %v1041 = vmul.f32 %v1001, %v1033
        %1042 = vrot.lane.b32.xlu0 %v283, 96
        %v1043 = vpop.permute.xlu0 %1042
        %v1046 = vsel %vm953, %v1034, 0
        %1048 = vmatprep.subr.mxu0 0.0
        %1049 = vmatpush1.msra.mxu0 %v1043
        %1050 = vmatprep.subr.mxu0 0.0
        %1051 = vmatpush1.msra.mxu0 0.0
        %1052 = vmatprep.subr.mxu0 0.0
        %1053 = vmatpush1.msra.mxu0 0.0
        %1054 = vmatprep.subr.mxu0 0.0
        %1055 = vmatpush1.msra.mxu0 0.0
        %1056 = vmatprep.subr.mxu0 0.0
        %1057 = vmatpush1.msra.mxu0 0.0
        %1058 = vmatprep.subr.mxu0 0.0
        %1059 = vmatpush1.msra.mxu0 0.0
        %1060 = vmatprep.subr.mxu0 0.0
        %1061 = vmatpush1.msra.mxu0 0.0
        %1062 = vmatprep.subr.mxu0 0.0
        %1063 = vmatpush1.msra.mxu0 0.0
        %1064 = vmatprep.subr.mxu0 0.0
        %1065 = vmatpush1.msra.mxu0 0.0
        %1066 = vmatprep.subr.mxu0 0.0
        %1067 = vmatpush1.msra.mxu0 0.0
        %1068 = vmatprep.subr.mxu0 0.0
        %1069 = vmatpush1.msra.mxu0 0.0
        %1070 = vmatprep.subr.mxu0 0.0
        %1071 = vmatpush1.msra.mxu0 0.0
        %1072 = vmatprep.subr.mxu0 0.0
        %1073 = vmatpush1.msra.mxu0 0.0
        %1074 = vmatprep.subr.mxu0 0.0
        %1075 = vmatpush1.msra.mxu0 0.0
        %1076 = vmatprep.subr.mxu0 0.0
        %1077 = vmatpush1.msra.mxu0 0.0
        %1078 = vmatprep.subr.mxu0 0.0
        %1079 = vmatpush1.msra.mxu0 0.0
        %1080 = vmatprep.subr.mxu0 0.0
        %1081 = vmatpush1.msra.mxu0 0.0
        %1082 = vmatprep.subr.mxu0 0.0
        %1083 = vmatpush1.msra.mxu0 0.0
        %1084 = vmatprep.subr.mxu0 0.0
        %1085 = vmatpush1.msra.mxu0 0.0
        %1086 = vmatprep.subr.mxu0 0.0
        %1087 = vmatpush1.msra.mxu0 0.0
        %1088 = vmatprep.subr.mxu0 0.0
        %1089 = vmatpush1.msra.mxu0 0.0
        %1090 = vmatprep.subr.mxu0 0.0
        %1091 = vmatpush1.msra.mxu0 0.0
        %1092 = vmatprep.subr.mxu0 0.0
        %1093 = vmatpush1.msra.mxu0 0.0
        %1094 = vmatprep.subr.mxu0 0.0
        %1095 = vmatpush1.msra.mxu0 0.0
        %1096 = vmatprep.subr.mxu0 0.0
        %1097 = vmatpush1.msra.mxu0 0.0
        %1098 = vmatprep.subr.mxu0 0.0
        %1099 = vmatpush1.msra.mxu0 0.0
        %1100 = vmatprep.subr.mxu0 0.0
        %1101 = vmatpush1.msra.mxu0 0.0
        %1102 = vmatprep.subr.mxu0 0.0
        %1103 = vmatpush1.msra.mxu0 0.0
        %1104 = vmatprep.subr.mxu0 0.0
        %1105 = vmatpush1.msra.mxu0 0.0
        %1106 = vmatprep.subr.mxu0 0.0
        %1107 = vmatpush1.msra.mxu0 0.0
        %1108 = vmatprep.subr.mxu0 0.0
        %1109 = vmatpush1.msra.mxu0 0.0
        %1110 = vmatprep.subr.mxu0 0.0
        %1111 = vmatpush1.msra.mxu0 0.0
        %1112 = vmatprep.mubr.f32.mxu0 0.0
        %1113 = vmatmul.mubr.f32.gmra.mrb[0].mxu0 %v1046
        %v1114 = vpop.f32.mrb[0].mxu0
        %v1115 = vadd.f32 0.0, %v1114
        %v1116 = vpop.f32.mrb[0].mxu0
        %1117 = vdwg.mxu0
        %1118 = vrot.lane.b32.xlu0 %v288, 96
        %v1119 = vpop.permute.xlu0 %1118
        %v1122 = vsel %vm953, %v1035, 0
        %1124 = vmatprep.subr.mxu0 0.0
        %1125 = vmatpush1.msra.mxu0 %v1119
        %1126 = vmatprep.subr.mxu0 0.0
        %1127 = vmatpush1.msra.mxu0 0.0
        %1128 = vmatprep.subr.mxu0 0.0
        %1129 = vmatpush1.msra.mxu0 0.0
        %1130 = vmatprep.subr.mxu0 0.0
        %1131 = vmatpush1.msra.mxu0 0.0
        %1132 = vmatprep.subr.mxu0 0.0
        %1133 = vmatpush1.msra.mxu0 0.0
        %1134 = vmatprep.subr.mxu0 0.0
        %1135 = vmatpush1.msra.mxu0 0.0
        %1136 = vmatprep.subr.mxu0 0.0
        %1137 = vmatpush1.msra.mxu0 0.0
        %1138 = vmatprep.subr.mxu0 0.0
        %1139 = vmatpush1.msra.mxu0 0.0
        %1140 = vmatprep.subr.mxu0 0.0
        %1141 = vmatpush1.msra.mxu0 0.0
        %1142 = vmatprep.subr.mxu0 0.0
        %1143 = vmatpush1.msra.mxu0 0.0
        %1144 = vmatprep.subr.mxu0 0.0
        %1145 = vmatpush1.msra.mxu0 0.0
        %1146 = vmatprep.subr.mxu0 0.0
        %1147 = vmatpush1.msra.mxu0 0.0
        %1148 = vmatprep.subr.mxu0 0.0
        %1149 = vmatpush1.msra.mxu0 0.0
        %1150 = vmatprep.subr.mxu0 0.0
        %1151 = vmatpush1.msra.mxu0 0.0
        %1152 = vmatprep.subr.mxu0 0.0
        %1153 = vmatpush1.msra.mxu0 0.0
        %1154 = vmatprep.subr.mxu0 0.0
        %1155 = vmatpush1.msra.mxu0 0.0
        %1156 = vmatprep.subr.mxu0 0.0
        %1157 = vmatpush1.msra.mxu0 0.0
        %1158 = vmatprep.subr.mxu0 0.0
        %1159 = vmatpush1.msra.mxu0 0.0
        %1160 = vmatprep.subr.mxu0 0.0
        %1161 = vmatpush1.msra.mxu0 0.0
        %1162 = vmatprep.subr.mxu0 0.0
        %1163 = vmatpush1.msra.mxu0 0.0
        %1164 = vmatprep.subr.mxu0 0.0
        %1165 = vmatpush1.msra.mxu0 0.0
        %1166 = vmatprep.subr.mxu0 0.0
        %1167 = vmatpush1.msra.mxu0 0.0
        %1168 = vmatprep.subr.mxu0 0.0
        %1169 = vmatpush1.msra.mxu0 0.0
        %1170 = vmatprep.subr.mxu0 0.0
        %1171 = vmatpush1.msra.mxu0 0.0
        %1172 = vmatprep.subr.mxu0 0.0
        %1173 = vmatpush1.msra.mxu0 0.0
        %1174 = vmatprep.subr.mxu0 0.0
        %1175 = vmatpush1.msra.mxu0 0.0
        %1176 = vmatprep.subr.mxu0 0.0
        %1177 = vmatpush1.msra.mxu0 0.0
        %1178 = vmatprep.subr.mxu0 0.0
        %1179 = vmatpush1.msra.mxu0 0.0
        %1180 = vmatprep.subr.mxu0 0.0
        %1181 = vmatpush1.msra.mxu0 0.0
        %1182 = vmatprep.subr.mxu0 0.0
        %1183 = vmatpush1.msra.mxu0 0.0
        %1184 = vmatprep.subr.mxu0 0.0
        %1185 = vmatpush1.msra.mxu0 0.0
        %1186 = vmatprep.subr.mxu0 0.0
        %1187 = vmatpush1.msra.mxu0 0.0
        %1188 = vmatprep.mubr.f32.mxu0 0.0
        %1189 = vmatmul.mubr.f32.gmra.mrb[0].mxu0 %v1122
        %v1190 = vpop.f32.mrb[0].mxu0
        %v1191 = vadd.f32 0.0, %v1190
        %v1192 = vpop.f32.mrb[0].mxu0
        %1193 = vdwg.mxu0
        %1194 = vrot.lane.b32.xlu0 %v293, 96
        %v1195 = vpop.permute.xlu0 %1194
        %v1198 = vsel %vm953, %v1036, 0
        %1200 = vmatprep.subr.mxu0 0.0
        %1201 = vmatpush1.msra.mxu0 %v1195
        %1202 = vmatprep.subr.mxu0 0.0
        %1203 = vmatpush1.msra.mxu0 0.0
        %1204 = vmatprep.subr.mxu0 0.0
        %1205 = vmatpush1.msra.mxu0 0.0
        %1206 = vmatprep.subr.mxu0 0.0
        %1207 = vmatpush1.msra.mxu0 0.0
        %1208 = vmatprep.subr.mxu0 0.0
        %1209 = vmatpush1.msra.mxu0 0.0
        %1210 = vmatprep.subr.mxu0 0.0
        %1211 = vmatpush1.msra.mxu0 0.0
        %1212 = vmatprep.subr.mxu0 0.0
        %1213 = vmatpush1.msra.mxu0 0.0
        %1214 = vmatprep.subr.mxu0 0.0
        %1215 = vmatpush1.msra.mxu0 0.0
        %1216 = vmatprep.subr.mxu0 0.0
        %1217 = vmatpush1.msra.mxu0 0.0
        %1218 = vmatprep.subr.mxu0 0.0
        %1219 = vmatpush1.msra.mxu0 0.0
        %1220 = vmatprep.subr.mxu0 0.0
        %1221 = vmatpush1.msra.mxu0 0.0
        %1222 = vmatprep.subr.mxu0 0.0
        %1223 = vmatpush1.msra.mxu0 0.0
        %1224 = vmatprep.subr.mxu0 0.0
        %1225 = vmatpush1.msra.mxu0 0.0
        %1226 = vmatprep.subr.mxu0 0.0
        %1227 = vmatpush1.msra.mxu0 0.0
        %1228 = vmatprep.subr.mxu0 0.0
        %1229 = vmatpush1.msra.mxu0 0.0
        %1230 = vmatprep.subr.mxu0 0.0
        %1231 = vmatpush1.msra.mxu0 0.0
        %1232 = vmatprep.subr.mxu0 0.0
        %1233 = vmatpush1.msra.mxu0 0.0
        %1234 = vmatprep.subr.mxu0 0.0
        %1235 = vmatpush1.msra.mxu0 0.0
        %1236 = vmatprep.subr.mxu0 0.0
        %1237 = vmatpush1.msra.mxu0 0.0
        %1238 = vmatprep.subr.mxu0 0.0
        %1239 = vmatpush1.msra.mxu0 0.0
        %1240 = vmatprep.subr.mxu0 0.0
        %1241 = vmatpush1.msra.mxu0 0.0
        %1242 = vmatprep.subr.mxu0 0.0
        %1243 = vmatpush1.msra.mxu0 0.0
        %1244 = vmatprep.subr.mxu0 0.0
        %1245 = vmatpush1.msra.mxu0 0.0
        %1246 = vmatprep.subr.mxu0 0.0
        %1247 = vmatpush1.msra.mxu0 0.0
        %1248 = vmatprep.subr.mxu0 0.0
        %1249 = vmatpush1.msra.mxu0 0.0
        %1250 = vmatprep.subr.mxu0 0.0
        %1251 = vmatpush1.msra.mxu0 0.0
        %1252 = vmatprep.subr.mxu0 0.0
        %1253 = vmatpush1.msra.mxu0 0.0
        %1254 = vmatprep.subr.mxu0 0.0
        %1255 = vmatpush1.msra.mxu0 0.0
        %1256 = vmatprep.subr.mxu0 0.0
        %1257 = vmatpush1.msra.mxu0 0.0
        %1258 = vmatprep.subr.mxu0 0.0
        %1259 = vmatpush1.msra.mxu0 0.0
        %1260 = vmatprep.subr.mxu0 0.0
        %1261 = vmatpush1.msra.mxu0 0.0
        %1262 = vmatprep.subr.mxu0 0.0
        %1263 = vmatpush1.msra.mxu0 0.0
        %1264 = vmatprep.mubr.f32.mxu0 0.0
        %1265 = vmatmul.mubr.f32.gmra.mrb[0].mxu0 %v1198
        %v1266 = vpop.f32.mrb[0].mxu0
        %v1267 = vadd.f32 0.0, %v1266
        %v1268 = vpop.f32.mrb[0].mxu0
        %1269 = vdwg.mxu0
        %1270 = vrot.lane.b32.xlu0 %v298, 96
        %v1271 = vpop.permute.xlu0 %1270
        %v1274 = vsel %vm953, %v1037, 0
        %1276 = vmatprep.subr.mxu0 0.0
        %1277 = vmatpush1.msra.mxu0 %v1271
        %1278 = vmatprep.subr.mxu0 0.0
        %1279 = vmatpush1.msra.mxu0 0.0
        %1280 = vmatprep.subr.mxu0 0.0
        %1281 = vmatpush1.msra.mxu0 0.0
        %1282 = vmatprep.subr.mxu0 0.0
        %1283 = vmatpush1.msra.mxu0 0.0
        %1284 = vmatprep.subr.mxu0 0.0
        %1285 = vmatpush1.msra.mxu0 0.0
        %1286 = vmatprep.subr.mxu0 0.0
        %1287 = vmatpush1.msra.mxu0 0.0
        %1288 = vmatprep.subr.mxu0 0.0
        %1289 = vmatpush1.msra.mxu0 0.0
        %1290 = vmatprep.subr.mxu0 0.0
        %1291 = vmatpush1.msra.mxu0 0.0
        %1292 = vmatprep.subr.mxu0 0.0
        %1293 = vmatpush1.msra.mxu0 0.0
        %1294 = vmatprep.subr.mxu0 0.0
        %1295 = vmatpush1.msra.mxu0 0.0
        %1296 = vmatprep.subr.mxu0 0.0
        %1297 = vmatpush1.msra.mxu0 0.0
        %1298 = vmatprep.subr.mxu0 0.0
        %1299 = vmatpush1.msra.mxu0 0.0
        %1300 = vmatprep.subr.mxu0 0.0
        %1301 = vmatpush1.msra.mxu0 0.0
        %1302 = vmatprep.subr.mxu0 0.0
        %1303 = vmatpush1.msra.mxu0 0.0
        %1304 = vmatprep.subr.mxu0 0.0
        %1305 = vmatpush1.msra.mxu0 0.0
        %1306 = vmatprep.subr.mxu0 0.0
        %1307 = vmatpush1.msra.mxu0 0.0
        %1308 = vmatprep.subr.mxu0 0.0
        %1309 = vmatpush1.msra.mxu0 0.0
        %1310 = vmatprep.subr.mxu0 0.0
        %1311 = vmatpush1.msra.mxu0 0.0
        %1312 = vmatprep.subr.mxu0 0.0
        %1313 = vmatpush1.msra.mxu0 0.0
        %1314 = vmatprep.subr.mxu0 0.0
        %1315 = vmatpush1.msra.mxu0 0.0
        %1316 = vmatprep.subr.mxu0 0.0
        %1317 = vmatpush1.msra.mxu0 0.0
        %1318 = vmatprep.subr.mxu0 0.0
        %1319 = vmatpush1.msra.mxu0 0.0
        %1320 = vmatprep.subr.mxu0 0.0
        %1321 = vmatpush1.msra.mxu0 0.0
        %1322 = vmatprep.subr.mxu0 0.0
        %1323 = vmatpush1.msra.mxu0 0.0
        %1324 = vmatprep.subr.mxu0 0.0
        %1325 = vmatpush1.msra.mxu0 0.0
        %1326 = vmatprep.subr.mxu0 0.0
        %1327 = vmatpush1.msra.mxu0 0.0
        %1328 = vmatprep.subr.mxu0 0.0
        %1329 = vmatpush1.msra.mxu0 0.0
        %1330 = vmatprep.subr.mxu0 0.0
        %1331 = vmatpush1.msra.mxu0 0.0
        %1332 = vmatprep.subr.mxu0 0.0
        %1333 = vmatpush1.msra.mxu0 0.0
        %1334 = vmatprep.subr.mxu0 0.0
        %1335 = vmatpush1.msra.mxu0 0.0
        %1336 = vmatprep.subr.mxu0 0.0
        %1337 = vmatpush1.msra.mxu0 0.0
        %1338 = vmatprep.subr.mxu0 0.0
        %1339 = vmatpush1.msra.mxu0 0.0
        %1340 = vmatprep.mubr.f32.mxu0 0.0
        %1341 = vmatmul.mubr.f32.gmra.mrb[0].mxu0 %v1274
        %v1342 = vpop.f32.mrb[0].mxu0
        %v1343 = vadd.f32 0.0, %v1342
        %v1344 = vpop.f32.mrb[0].mxu0
        %1345 = vdwg.mxu0
        %1346 = vrot.lane.b32.xlu0 %v303, 96
        %v1347 = vpop.permute.xlu0 %1346
        %v1350 = vsel %vm953, %v1038, 0
        %1352 = vmatprep.subr.mxu0 0.0
        %1353 = vmatpush1.msra.mxu0 %v1347
        %1354 = vmatprep.subr.mxu0 0.0
        %1355 = vmatpush1.msra.mxu0 0.0
        %1356 = vmatprep.subr.mxu0 0.0
        %1357 = vmatpush1.msra.mxu0 0.0
        %1358 = vmatprep.subr.mxu0 0.0
        %1359 = vmatpush1.msra.mxu0 0.0
        %1360 = vmatprep.subr.mxu0 0.0
        %1361 = vmatpush1.msra.mxu0 0.0
        %1362 = vmatprep.subr.mxu0 0.0
        %1363 = vmatpush1.msra.mxu0 0.0
        %1364 = vmatprep.subr.mxu0 0.0
        %1365 = vmatpush1.msra.mxu0 0.0
        %1366 = vmatprep.subr.mxu0 0.0
        %1367 = vmatpush1.msra.mxu0 0.0
        %1368 = vmatprep.subr.mxu0 0.0
        %1369 = vmatpush1.msra.mxu0 0.0
        %1370 = vmatprep.subr.mxu0 0.0
        %1371 = vmatpush1.msra.mxu0 0.0
        %1372 = vmatprep.subr.mxu0 0.0
        %1373 = vmatpush1.msra.mxu0 0.0
        %1374 = vmatprep.subr.mxu0 0.0
        %1375 = vmatpush1.msra.mxu0 0.0
        %1376 = vmatprep.subr.mxu0 0.0
        %1377 = vmatpush1.msra.mxu0 0.0
        %1378 = vmatprep.subr.mxu0 0.0
        %1379 = vmatpush1.msra.mxu0 0.0
        %1380 = vmatprep.subr.mxu0 0.0
        %1381 = vmatpush1.msra.mxu0 0.0
        %1382 = vmatprep.subr.mxu0 0.0
        %1383 = vmatpush1.msra.mxu0 0.0
        %1384 = vmatprep.subr.mxu0 0.0
        %1385 = vmatpush1.msra.mxu0 0.0
        %1386 = vmatprep.subr.mxu0 0.0
        %1387 = vmatpush1.msra.mxu0 0.0
        %1388 = vmatprep.subr.mxu0 0.0
        %1389 = vmatpush1.msra.mxu0 0.0
        %1390 = vmatprep.subr.mxu0 0.0
        %1391 = vmatpush1.msra.mxu0 0.0
        %1392 = vmatprep.subr.mxu0 0.0
        %1393 = vmatpush1.msra.mxu0 0.0
        %1394 = vmatprep.subr.mxu0 0.0
        %1395 = vmatpush1.msra.mxu0 0.0
        %1396 = vmatprep.subr.mxu0 0.0
        %1397 = vmatpush1.msra.mxu0 0.0
        %1398 = vmatprep.subr.mxu0 0.0
        %1399 = vmatpush1.msra.mxu0 0.0
        %1400 = vmatprep.subr.mxu0 0.0
        %1401 = vmatpush1.msra.mxu0 0.0
        %1402 = vmatprep.subr.mxu0 0.0
        %1403 = vmatpush1.msra.mxu0 0.0
        %1404 = vmatprep.subr.mxu0 0.0
        %1405 = vmatpush1.msra.mxu0 0.0
        %1406 = vmatprep.subr.mxu0 0.0
        %1407 = vmatpush1.msra.mxu0 0.0
        %1408 = vmatprep.subr.mxu0 0.0
        %1409 = vmatpush1.msra.mxu0 0.0
        %1410 = vmatprep.subr.mxu0 0.0
        %1411 = vmatpush1.msra.mxu0 0.0
        %1412 = vmatprep.subr.mxu0 0.0
        %1413 = vmatpush1.msra.mxu0 0.0
        %1414 = vmatprep.subr.mxu0 0.0
        %1415 = vmatpush1.msra.mxu0 0.0
        %1416 = vmatprep.mubr.f32.mxu0 0.0
        %1417 = vmatmul.mubr.f32.gmra.mrb[0].mxu0 %v1350
        %v1418 = vpop.f32.mrb[0].mxu0
        %v1419 = vadd.f32 0.0, %v1418
        %v1420 = vpop.f32.mrb[0].mxu0
        %1421 = vdwg.mxu0
        %1422 = vrot.lane.b32.xlu0 %v308, 96
        %v1423 = vpop.permute.xlu0 %1422
        %v1426 = vsel %vm953, %v1039, 0
        %1428 = vmatprep.subr.mxu0 0.0
        %1429 = vmatpush1.msra.mxu0 %v1423
        %1430 = vmatprep.subr.mxu0 0.0
        %1431 = vmatpush1.msra.mxu0 0.0
        %1432 = vmatprep.subr.mxu0 0.0
        %1433 = vmatpush1.msra.mxu0 0.0
        %1434 = vmatprep.subr.mxu0 0.0
        %1435 = vmatpush1.msra.mxu0 0.0
        %1436 = vmatprep.subr.mxu0 0.0
        %1437 = vmatpush1.msra.mxu0 0.0
        %1438 = vmatprep.subr.mxu0 0.0
        %1439 = vmatpush1.msra.mxu0 0.0
        %1440 = vmatprep.subr.mxu0 0.0
        %1441 = vmatpush1.msra.mxu0 0.0
        %1442 = vmatprep.subr.mxu0 0.0
        %1443 = vmatpush1.msra.mxu0 0.0
        %1444 = vmatprep.subr.mxu0 0.0
        %1445 = vmatpush1.msra.mxu0 0.0
        %1446 = vmatprep.subr.mxu0 0.0
        %1447 = vmatpush1.msra.mxu0 0.0
        %1448 = vmatprep.subr.mxu0 0.0
        %1449 = vmatpush1.msra.mxu0 0.0
        %1450 = vmatprep.subr.mxu0 0.0
        %1451 = vmatpush1.msra.mxu0 0.0
        %1452 = vmatprep.subr.mxu0 0.0
        %1453 = vmatpush1.msra.mxu0 0.0
        %1454 = vmatprep.subr.mxu0 0.0
        %1455 = vmatpush1.msra.mxu0 0.0
        %1456 = vmatprep.subr.mxu0 0.0
        %1457 = vmatpush1.msra.mxu0 0.0
        %1458 = vmatprep.subr.mxu0 0.0
        %1459 = vmatpush1.msra.mxu0 0.0
        %1460 = vmatprep.subr.mxu0 0.0
        %1461 = vmatpush1.msra.mxu0 0.0
        %1462 = vmatprep.subr.mxu0 0.0
        %1463 = vmatpush1.msra.mxu0 0.0
        %1464 = vmatprep.subr.mxu0 0.0
        %1465 = vmatpush1.msra.mxu0 0.0
        %1466 = vmatprep.subr.mxu0 0.0
        %1467 = vmatpush1.msra.mxu0 0.0
        %1468 = vmatprep.subr.mxu0 0.0
        %1469 = vmatpush1.msra.mxu0 0.0
        %1470 = vmatprep.subr.mxu0 0.0
        %1471 = vmatpush1.msra.mxu0 0.0
        %1472 = vmatprep.subr.mxu0 0.0
        %1473 = vmatpush1.msra.mxu0 0.0
        %1474 = vmatprep.subr.mxu0 0.0
        %1475 = vmatpush1.msra.mxu0 0.0
        %1476 = vmatprep.subr.mxu0 0.0
        %1477 = vmatpush1.msra.mxu0 0.0
        %1478 = vmatprep.subr.mxu0 0.0
        %1479 = vmatpush1.msra.mxu0 0.0
        %1480 = vmatprep.subr.mxu0 0.0
        %1481 = vmatpush1.msra.mxu0 0.0
        %1482 = vmatprep.subr.mxu0 0.0
        %1483 = vmatpush1.msra.mxu0 0.0
        %1484 = vmatprep.subr.mxu0 0.0
        %1485 = vmatpush1.msra.mxu0 0.0
        %1486 = vmatprep.subr.mxu0 0.0
        %1487 = vmatpush1.msra.mxu0 0.0
        %1488 = vmatprep.subr.mxu0 0.0
        %1489 = vmatpush1.msra.mxu0 0.0
        %1490 = vmatprep.subr.mxu0 0.0
        %1491 = vmatpush1.msra.mxu0 0.0
        %1492 = vmatprep.mubr.f32.mxu0 0.0
        %1493 = vmatmul.mubr.f32.gmra.mrb[0].mxu0 %v1426
        %v1494 = vpop.f32.mrb[0].mxu0
        %v1495 = vadd.f32 0.0, %v1494
        %v1496 = vpop.f32.mrb[0].mxu0
        %1497 = vdwg.mxu0
        %1498 = vrot.lane.b32.xlu0 %v313, 96
        %v1499 = vpop.permute.xlu0 %1498
        %v1502 = vsel %vm953, %v1040, 0
        %1504 = vmatprep.subr.mxu0 0.0
        %1505 = vmatpush1.msra.mxu0 %v1499
        %1506 = vmatprep.subr.mxu0 0.0
        %1507 = vmatpush1.msra.mxu0 0.0
        %1508 = vmatprep.subr.mxu0 0.0
        %1509 = vmatpush1.msra.mxu0 0.0
        %1510 = vmatprep.subr.mxu0 0.0
        %1511 = vmatpush1.msra.mxu0 0.0
        %1512 = vmatprep.subr.mxu0 0.0
        %1513 = vmatpush1.msra.mxu0 0.0
        %1514 = vmatprep.subr.mxu0 0.0
        %1515 = vmatpush1.msra.mxu0 0.0
        %1516 = vmatprep.subr.mxu0 0.0
        %1517 = vmatpush1.msra.mxu0 0.0
        %1518 = vmatprep.subr.mxu0 0.0
        %1519 = vmatpush1.msra.mxu0 0.0
        %1520 = vmatprep.subr.mxu0 0.0
        %1521 = vmatpush1.msra.mxu0 0.0
        %1522 = vmatprep.subr.mxu0 0.0
        %1523 = vmatpush1.msra.mxu0 0.0
        %1524 = vmatprep.subr.mxu0 0.0
        %1525 = vmatpush1.msra.mxu0 0.0
        %1526 = vmatprep.subr.mxu0 0.0
        %1527 = vmatpush1.msra.mxu0 0.0
        %1528 = vmatprep.subr.mxu0 0.0
        %1529 = vmatpush1.msra.mxu0 0.0
        %1530 = vmatprep.subr.mxu0 0.0
        %1531 = vmatpush1.msra.mxu0 0.0
        %1532 = vmatprep.subr.mxu0 0.0
        %1533 = vmatpush1.msra.mxu0 0.0
        %1534 = vmatprep.subr.mxu0 0.0
        %1535 = vmatpush1.msra.mxu0 0.0
        %1536 = vmatprep.subr.mxu0 0.0
        %1537 = vmatpush1.msra.mxu0 0.0
        %1538 = vmatprep.subr.mxu0 0.0
        %1539 = vmatpush1.msra.mxu0 0.0
        %1540 = vmatprep.subr.mxu0 0.0
        %1541 = vmatpush1.msra.mxu0 0.0
        %1542 = vmatprep.subr.mxu0 0.0
        %1543 = vmatpush1.msra.mxu0 0.0
        %1544 = vmatprep.subr.mxu0 0.0
        %1545 = vmatpush1.msra.mxu0 0.0
        %1546 = vmatprep.subr.mxu0 0.0
        %1547 = vmatpush1.msra.mxu0 0.0
        %1548 = vmatprep.subr.mxu0 0.0
        %1549 = vmatpush1.msra.mxu0 0.0
        %1550 = vmatprep.subr.mxu0 0.0
        %1551 = vmatpush1.msra.mxu0 0.0
        %1552 = vmatprep.subr.mxu0 0.0
        %1553 = vmatpush1.msra.mxu0 0.0
        %1554 = vmatprep.subr.mxu0 0.0
        %1555 = vmatpush1.msra.mxu0 0.0
        %1556 = vmatprep.subr.mxu0 0.0
        %1557 = vmatpush1.msra.mxu0 0.0
        %1558 = vmatprep.subr.mxu0 0.0
        %1559 = vmatpush1.msra.mxu0 0.0
        %1560 = vmatprep.subr.mxu0 0.0
        %1561 = vmatpush1.msra.mxu0 0.0
        %1562 = vmatprep.subr.mxu0 0.0
        %1563 = vmatpush1.msra.mxu0 0.0
        %1564 = vmatprep.subr.mxu0 0.0
        %1565 = vmatpush1.msra.mxu0 0.0
        %1566 = vmatprep.subr.mxu0 0.0
        %1567 = vmatpush1.msra.mxu0 0.0
        %1568 = vmatprep.mubr.f32.mxu0 0.0
        %1569 = vmatmul.mubr.f32.gmra.mrb[0].mxu0 %v1502
        %v1570 = vpop.f32.mrb[0].mxu0
        %v1571 = vadd.f32 0.0, %v1570
        %v1572 = vpop.f32.mrb[0].mxu0
        %1573 = vdwg.mxu0
        %1574 = vrot.lane.b32.xlu0 %v318, 96
        %v1575 = vpop.permute.xlu0 %1574
        %v1578 = vsel %vm953, %v1041, 0
        %1580 = vmatprep.subr.mxu0 0.0
        %1581 = vmatpush1.msra.mxu0 %v1575
        %1582 = vmatprep.subr.mxu0 0.0
        %1583 = vmatpush1.msra.mxu0 0.0
        %1584 = vmatprep.subr.mxu0 0.0
        %1585 = vmatpush1.msra.mxu0 0.0
        %1586 = vmatprep.subr.mxu0 0.0
        %1587 = vmatpush1.msra.mxu0 0.0
        %1588 = vmatprep.subr.mxu0 0.0
        %1589 = vmatpush1.msra.mxu0 0.0
        %1590 = vmatprep.subr.mxu0 0.0
        %1591 = vmatpush1.msra.mxu0 0.0
        %1592 = vmatprep.subr.mxu0 0.0
        %1593 = vmatpush1.msra.mxu0 0.0
        %1594 = vmatprep.subr.mxu0 0.0
        %1595 = vmatpush1.msra.mxu0 0.0
        %1596 = vmatprep.subr.mxu0 0.0
        %1597 = vmatpush1.msra.mxu0 0.0
        %1598 = vmatprep.subr.mxu0 0.0
        %1599 = vmatpush1.msra.mxu0 0.0
        %1600 = vmatprep.subr.mxu0 0.0
        %1601 = vmatpush1.msra.mxu0 0.0
        %1602 = vmatprep.subr.mxu0 0.0
        %1603 = vmatpush1.msra.mxu0 0.0
        %1604 = vmatprep.subr.mxu0 0.0
        %1605 = vmatpush1.msra.mxu0 0.0
        %1606 = vmatprep.subr.mxu0 0.0
        %1607 = vmatpush1.msra.mxu0 0.0
        %1608 = vmatprep.subr.mxu0 0.0
        %1609 = vmatpush1.msra.mxu0 0.0
        %1610 = vmatprep.subr.mxu0 0.0
        %1611 = vmatpush1.msra.mxu0 0.0
        %1612 = vmatprep.subr.mxu0 0.0
        %1613 = vmatpush1.msra.mxu0 0.0
        %1614 = vmatprep.subr.mxu0 0.0
        %1615 = vmatpush1.msra.mxu0 0.0
        %1616 = vmatprep.subr.mxu0 0.0
        %1617 = vmatpush1.msra.mxu0 0.0
        %1618 = vmatprep.subr.mxu0 0.0
        %1619 = vmatpush1.msra.mxu0 0.0
        %1620 = vmatprep.subr.mxu0 0.0
        %1621 = vmatpush1.msra.mxu0 0.0
        %1622 = vmatprep.subr.mxu0 0.0
        %1623 = vmatpush1.msra.mxu0 0.0
        %1624 = vmatprep.subr.mxu0 0.0
        %1625 = vmatpush1.msra.mxu0 0.0
        %1626 = vmatprep.subr.mxu0 0.0
        %1627 = vmatpush1.msra.mxu0 0.0
        %1628 = vmatprep.subr.mxu0 0.0
        %1629 = vmatpush1.msra.mxu0 0.0
        %1630 = vmatprep.subr.mxu0 0.0
        %1631 = vmatpush1.msra.mxu0 0.0
        %1632 = vmatprep.subr.mxu0 0.0
        %1633 = vmatpush1.msra.mxu0 0.0
        %1634 = vmatprep.subr.mxu0 0.0
        %1635 = vmatpush1.msra.mxu0 0.0
        %1636 = vmatprep.subr.mxu0 0.0
        %1637 = vmatpush1.msra.mxu0 0.0
        %1638 = vmatprep.subr.mxu0 0.0
        %1639 = vmatpush1.msra.mxu0 0.0
        %1640 = vmatprep.subr.mxu0 0.0
        %1641 = vmatpush1.msra.mxu0 0.0
        %1642 = vmatprep.subr.mxu0 0.0
        %1643 = vmatpush1.msra.mxu0 0.0
        %1644 = vmatprep.mubr.f32.mxu0 0.0
        %1645 = vmatmul.mubr.f32.gmra.mrb[0].mxu0 %v1578
        %v1646 = vpop.f32.mrb[0].mxu0
        %v1647 = vadd.f32 0.0, %v1646
        %v1648 = vpop.f32.mrb[0].mxu0
        %1649 = vdwg.mxu0
        %1650 = vst.msk [vmem:[%s176] sm:$0xff] %vm324, %v1115
        %1651 = vst.msk [vmem:[%s176 + $0x8] sm:$0xff] %vm324, %v1191
        %1652 = vst.msk [vmem:[%s176 + $0x10] sm:$0xff] %vm324, %v1267
        %1653 = vst.msk [vmem:[%s176 + $0x18] sm:$0xff] %vm324, %v1343
        %1654 = vst.msk [vmem:[%s176 + $0x20] sm:$0xff] %vm324, %v1419
        %1655 = vst.msk [vmem:[%s176 + $0x28] sm:$0xff] %vm324, %v1495
        %1656 = vst.msk [vmem:[%s176 + $0x30] sm:$0xff] %vm324, %v1571
        %1657 = vst.msk [vmem:[%s176 + $0x38] sm:$0xff] %vm324, %v1647
        %s1658 = sand.u32 %s75, 1
        %s1659 = scalar_lea.sflag [#allocation4], %s1658
        %s1660 = sand.u32 %s75, 1
        %s1661 = smul.addr %s1660, 64
        %s1662 = scalar_lea.vmem [#allocation7], %s1661
        // Predicated region
        $region37: #{tpu_custom_call.1} parent=27 // pred_check
          %p1663 = pneg %p85
        $region38: #{tpu_custom_call.1} parent=27 // pred_check_branch
          %1665 = sbr.rel (%p1663) target = $region40
        $region39: #{tpu_custom_call.1} parent=27 // pred_region
          %s1666 = smul.u32 8, %s20
          %s1668 = ssub.s32 1024, 1024
          %1669 = vsyncadd %s1659, %s1668
          %s1670 = smul.addr %s1666, 128
          %s1671 = scalar_lea.hbm %s2, %s1670
          %s1672 = sshll.u32 %s1662, 4
          %s1673 = int_to_ptr.vmem [resolvable:$true] %s1672
          %1678 = dma.vmem_to_hbm [thread:$0]  %s1673, 1024, %s1671, %s1659, 128, 128, 8
        $region40: #{tpu_custom_call.1} parent=27 // pred_fallthru
          _
      $region28: #{tpu_custom_call.1} parent=5 // pred_fallthru
        _
      %p1679 = scmp.le.s32.totalorder 2, %s15
      // Predicated region
      $region41: #{tpu_custom_call.1} parent=5 // pred_check
        %p1680 = pneg %p1679
      $region42: #{tpu_custom_call.1} parent=5 // pred_check_branch
        %1682 = sbr.rel (%p1680) target = $region44
      $region43: #{tpu_custom_call.1} parent=5 // pred_region
        %s1683 = ssub.s32 %s15, 2
        // Predicated region
        $region45: #{tpu_custom_call.1} parent=43 // pred_check
          %p1684 = pneg %p91
        $region46: #{tpu_custom_call.1} parent=43 // pred_check_branch
          %1686 = sbr.rel (%p1684) target = $region48
        $region47: #{tpu_custom_call.1} parent=43 // pred_region
          %s1687 = sand.u32 %s76, 1
          %s1688 = scalar_lea.sflag [#allocation4], %s1687
          %s1689 = sand.u32 %s76, 1
          %s1690 = smul.addr %s1689, 64
          %s1691 = scalar_lea.vmem [#allocation7], %s1690
          %1692 = dma.done %s1688, 1024
        $region48: #{tpu_custom_call.1} parent=43 // pred_fallthru
          _
      $region44: #{tpu_custom_call.1} parent=5 // pred_fallthru
        _
    $region6: #{tpu_custom_call.1} parent=1 // loop_footer
      %s19 = sadd.s32 1, %s15
    $region7: #{tpu_custom_call.1} parent=1 // loop_footer_branch
      %14 = sbr.rel target = $region3
    $region8: #{tpu_custom_call.1} parent=1 // loop_exit
      _
    %1693 = vsyncpa [#allocation3], 1
    %s1694 = scalar_lea.sflag [#allocation3], 1
    %1695 = vsyncpa %s1694, 1
    %1696 = vsyncpa [#allocation6], 1
    %1697 = vsyncpa [#allocation4], 1
    %s1698 = scalar_lea.sflag [#allocation4], 1
    %1699 = vsyncpa %s1698, 1

</llo_original>
